<compile_context>
chip_gen: v5e
topology: v5e:2x2
jax: 0.10.0
libtpu: 0.0.40
codegen_flags: <defaults>
</compile_context>

<pallas_src>
import functools

import jax
import jax.numpy as jnp
from jax.experimental import pallas as pl
from jax.experimental.pallas import tpu as pltpu


# ----------------------------------------------------------------------------
# Pass 1 kernel: per-pixel DAG of 1x1 convs -> spatial attention, fused with the
# running spatial mean (pooled = mean(x * att)) accumulation over the inner HW axis.
# ----------------------------------------------------------------------------
def _sam_kernel(x_ref, wa_ref, ba_ref, wb_ref, bb_ref, w5_ref, b5_ref,
                att_ref, pool_ref, *, inv_hw):
    # x_ref   : (1, C, T) f32      wa_ref : (65, C) = [W0; W1; w3]  (f32 or bf16)
    # ba_ref  : (65, 1) f32        wb_ref : (33, 32) = [W2; w4]     (f32 or bf16)
    # bb_ref  : (33, 1) f32        w5_ref : (32, 1) f32   b5_ref : (1,) SMEM f32
    # att_ref : (1, 1, T) spatial attention
    # pool_ref: (1, 1, C, 1) partial spatial mean of sam = x*att, accumulated over
    #           the inner ("arbitrary") HW grid axis.
    @pl.when(pl.program_id(2) == 0)
    def _init():
        pool_ref[...] = jnp.zeros_like(pool_ref)

    t0 = x_ref[0]                                                    # (C, T) f32

    # Fused "reads x" matmul: rows 0:32 -> op0, 32:64 -> op1, 64 -> op3.
    u = jnp.dot(wa_ref[...], t0.astype(wa_ref.dtype),
                preferred_element_type=jnp.float32) + ba_ref[...]    # (65, T) f32
    a1 = jax.nn.relu(u[0:32, :])                                     # (32, T)
    a2 = jax.nn.relu(u[32:64, :])                                    # (32, T)
    s3 = jax.nn.sigmoid(u[64:65, :])                                 # (1, T)

    # Fused "reads a1" matmul: rows 0:32 -> op2, 32 -> op4.
    v = jnp.dot(wb_ref[...], a1.astype(wb_ref.dtype),
                preferred_element_type=jnp.float32) + bb_ref[...]    # (33, T) f32
    a2 = a2 + jax.nn.relu(v[0:32, :])                                # (32, T)
    s4 = jax.nn.sigmoid(v[32:33, :])                                 # (1, T)

    # op5 (a2 -> 1 channel) as a sublane reduction (avoids an M=1 matmul).
    s5 = jax.nn.sigmoid(
        jnp.sum(a2 * w5_ref[...], axis=0, keepdims=True) + b5_ref[0])

    att = (s3 + s4 + s5) * (1.0 / 3.0)                               # (1, T)
    att_ref[0] = att
    # Partial spatial mean of sam = x*att.  Padded HW columns hold x == 0, so they
    # contribute nothing regardless of the attention value there.
    pool_ref[0, 0] += jnp.sum(t0 * att, axis=1, keepdims=True) * inv_hw


# ----------------------------------------------------------------------------
# Pass 2 kernel: pure DMA-bound scale-and-store, out = x * att_spatial * att_channel.
# ----------------------------------------------------------------------------
def _scale_kernel(x_ref, att_sp_ref, att_c_ref, o_ref):
    # x_ref: (1, C, T)  att_sp_ref: (1, 1, T)  att_c_ref: (1, C, 1)  o_ref: (1, C, T)
    o_ref[0] = x_ref[0] * att_sp_ref[0] * att_c_ref[0]


# ----------------------------------------------------------------------------
# Parameter construction (natural PyTorch-like shapes) + packing for the kernels.
# ----------------------------------------------------------------------------
def init_params(C, seed=42):
    keys = jax.random.split(jax.random.PRNGKey(seed), 24)
    k = iter(keys)

    def w(shape, scale=0.2):
        return (scale * jax.random.normal(next(k), shape)).astype(jnp.float32)

    # SAM cell (channel_list = [C, 32, 32, 1]), ops are 1x1 Conv2d (weight (Cout, Cin)).
    sam_params = (
        (w((32, C)),  w((32,))),   # mixop0: C  -> 32  (relu)
        (w((32, C)),  w((32,))),   # mixop1: C  -> 32  (relu)
        (w((32, 32)), w((32,))),   # mixop2: 32 -> 32  (relu)
        (w((1, C)),   w((1,))),    # mixop3: C  -> 1   (sigmoid)
        (w((1, 32)),  w((1,))),    # mixop4: 32 -> 1   (sigmoid)
        (w((1, 32)),  w((1,))),    # mixop5: 32 -> 1   (sigmoid)
    )
    # CAM cell (channel_list = [1, 32, 32, 1]), ops are kernel-1 Conv1d.
    cam_params = (
        (w((32, 1)),  w((32,))),   # mixop0: 1  -> 32  (relu)
        (w((32, 1)),  w((32,))),   # mixop1: 1  -> 32  (relu)
        (w((32, 32)), w((32,))),   # mixop2: 32 -> 32  (relu)
        (w((1, 1)),   w((1,))),    # mixop3: 1  -> 1   (sigmoid)
        (w((1, 32)),  w((1,))),    # mixop4: 32 -> 1   (sigmoid)
        (w((1, 32)),  w((1,))),    # mixop5: 32 -> 1   (sigmoid)
    )
    return sam_params, cam_params


def _pack_sam(sam_params):
    (W0, b0), (W1, b1), (W2, b2), (w3, b3), (w4, b4), (w5, b5) = sam_params
    W_A = jnp.concatenate([W0, W1, w3], axis=0)              # (65, C)
    B_A = jnp.concatenate([b0, b1, b3])[:, None]             # (65, 1)
    W_B = jnp.concatenate([W2, w4], axis=0)                  # (33, 32)
    B_B = jnp.concatenate([b2, b4])[:, None]                 # (33, 1)
    w5_col = w5.reshape(32, 1)                               # (32, 1)
    b5_s = b5.reshape(1).astype(jnp.float32)                 # (1,)   -> SMEM
    return W_A, B_A, W_B, B_B, w5_col, b5_s


def _cam_channel_att(pooled_bc, cam_params):
    """Tiny CAM channel DAG on pooled (B, C) -> channel attention (B, C).  Plain JAX:
    it touches only B*C values, so hoisting it out of the per-HW-tile loop keeps the
    pass-2 kernel a pure scale-and-store."""
    (cw0, cb0), (cw1, cb1), (cw2, cb2), (cw3, cb3), (cw4, cb4), (cw5, cb5) = cam_params
    y = pooled_bc[:, None, :]                                        # (B, 1, C)
    C1 = jax.nn.relu(jnp.einsum('oi,bic->boc', cw0, y) + cb0[None, :, None])
    C2 = (jax.nn.relu(jnp.einsum('oi,bic->boc', cw1, y) + cb1[None, :, None])
          + jax.nn.relu(jnp.einsum('oi,bic->boc', cw2, C1) + cb2[None, :, None]))
    t3 = jax.nn.sigmoid(jnp.einsum('oi,bic->boc', cw3, y) + cb3[None, :, None])
    t4 = jax.nn.sigmoid(jnp.einsum('oi,bic->boc', cw4, C1) + cb4[None, :, None])
    t5 = jax.nn.sigmoid(jnp.einsum('oi,bic->boc', cw5, C2) + cb5[None, :, None])
    return ((t3 + t4 + t5) / 3.0)[:, 0, :]                           # (B, C)


# ----------------------------------------------------------------------------
# Tiling / VMEM heuristics.
# ----------------------------------------------------------------------------
def _round_up(x, m):
    return ((x + m - 1) // m) * m


def _choose_hw_tiling(hw, c):
    """Lane-aligned HW tile sized so one (C, TILE) f32 x-block is ~1 MiB, clamped to
    [128, 8192] lanes.  Returns (TILE, HWP) with HWP a multiple of TILE (>= hw;
    the caller zero-pads)."""
    target = (1 << 20) // (4 * max(int(c), 1))
    target = max(512, min(8192, _round_up(max(target, 128), 128)))
    hwp128 = _round_up(hw, 128)
    if hwp128 <= target:
        return hwp128, hwp128                       # one tile per (batch, hw-pass)
    for t in range(target, 127, -128):              # largest lane-aligned exact divisor
        if hw % t == 0:
            return t, hw
    for t in range(target, 127, -128):              # divisor of the 128-padded extent
        if hwp128 % t == 0:
            return t, hwp128
    return 128, hwp128


def _vmem_capacity_bytes():
    try:
        info = pltpu.get_tpu_info()
        cap = getattr(info, "vmem_capacity_bytes", None)
        if cap:
            return int(cap)
    except Exception:
        pass
    return 64 << 20   # conservative fallback (v7x per-TensorCore VMEM)


def _vmem_limit_bytes(C, TILE):
    cap = _vmem_capacity_bytes()
    block_x = C * TILE * 4
    # Pass-1 compiler intermediates (u:65 + a1:32 + a2:32 + v:33 + att rows) scale
    # with TILE, not C.
    interm = 176 * TILE * 4
    need = 4 * block_x + 4 * TILE * 4 + interm + (4 << 20)
    return int(min(cap // 2, max(16 << 20, need)))


# ----------------------------------------------------------------------------
# Wrapper: NCHW in / NCHW out (no transposes -- NCHW == (B, C, HW) reshape).
# ----------------------------------------------------------------------------
def scam_s_forward(x_nchw, sam_params, cam_params, *, matmul_in_bf16=False):
    B, C, H, W = x_nchw.shape
    HW = H * W
    x = x_nchw.astype(jnp.float32).reshape(B, C, HW)

    TILE, HWP = _choose_hw_tiling(HW, C)
    if HWP != HW:
        x = jnp.pad(x, ((0, 0), (0, 0), (0, HWP - HW)))
    n_hw = HWP // TILE

    # Megacore (v7x): give pass 1 a second "parallel" axis over HW when the batch
    # alone cannot feed two TensorCores.  Pooled is accumulated per (b, hw_outer)
    # and the tiny cross-outer reduction is done in JAX below.
    if B >= 2 or n_hw < 2 or (n_hw % 2 != 0):
        n_outer = 1
    else:
        n_outer = 2
    n_inner = n_hw // n_outer

    W_A, B_A, W_B, B_B, w5_col, b5_s = _pack_sam(sam_params)
    if matmul_in_bf16:
        # bf16 matmul inputs (accumulation stays f32); biases / elementwise stay f32.
        W_A = W_A.astype(jnp.bfloat16)
        W_B = W_B.astype(jnp.bfloat16)

    vmem_limit = _vmem_limit_bytes(C, TILE)
    smem_spec = pl.BlockSpec(memory_space=pltpu.MemorySpace.SMEM)

    def resident(arr):  # small weight, same block for every grid step (pass 1 only)
        return pl.BlockSpec(arr.shape, lambda b, o, t: (0, 0))

    # ---- Pass 1: spatial attention (B,1,HWP) + partial pooled (B,n_outer,C,1) ----
    att_sp, pooled_part = pl.pallas_call(
        functools.partial(_sam_kernel, inv_hw=1.0 / HW),
        out_shape=(jax.ShapeDtypeStruct((B, 1, HWP), jnp.float32),
                   jax.ShapeDtypeStruct((B, n_outer, C, 1), jnp.float32)),
        grid=(B, n_outer, n_inner),
        in_specs=[
            pl.BlockSpec((1, C, TILE), lambda b, o, t: (b, 0, o * n_inner + t)),
            resident(W_A), resident(B_A), resident(W_B), resident(B_B),
            resident(w5_col),
            smem_spec,
        ],
        out_specs=(
            pl.BlockSpec((1, 1, TILE), lambda b, o, t: (b, 0, o * n_inner + t)),
            pl.BlockSpec((1, 1, C, 1), lambda b, o, t: (b, o, 0, 0)),
        ),
        compiler_params=pltpu.CompilerParams(
            dimension_semantics=("parallel", "parallel", "arbitrary"),
            vmem_limit_bytes=vmem_limit),
    )(x, W_A, B_A, W_B, B_B, w5_col, b5_s)

    # ---- Tiny CAM channel DAG on pooled (hoisted out of the tile loop) -----------
    pooled = jnp.sum(pooled_part, axis=1)[:, :, 0]                   # (B, C)
    att_c = _cam_channel_att(pooled, cam_params)[:, :, None]         # (B, C, 1)

    # ---- Pass 2: out = x * att_sp * att_c (pure DMA-bound scale-and-store) -------
    # No input_output_aliases: x is the (non-donated) original input here, so
    # aliasing it to the output would force XLA to insert a defensive copy.
    out = pl.pallas_call(
        _scale_kernel,
        out_shape=jax.ShapeDtypeStruct((B, C, HWP), jnp.float32),
        grid=(B, n_hw),
        in_specs=[
            pl.BlockSpec((1, C, TILE), lambda b, t: (b, 0, t)),      # x tile
            pl.BlockSpec((1, 1, TILE), lambda b, t: (b, 0, t)),      # spatial att tile
            pl.BlockSpec((1, C, 1), lambda b, t: (b, 0, 0)),         # channel att (resident)
        ],
        out_specs=pl.BlockSpec((1, C, TILE), lambda b, t: (b, 0, t)),
        compiler_params=pltpu.CompilerParams(
            dimension_semantics=("parallel", "parallel"),
            vmem_limit_bytes=vmem_limit),
    )(x, att_sp, att_c)

    if HWP != HW:
        out = out[:, :, :HW]
    return out.reshape(B, C, H, W)


# ----------------------------------------------------------------------------
# Pure-JAX reference (same math, natural parameters) for the correctness check.
# ----------------------------------------------------------------------------
def ref_forward(x_nchw, sam_params, cam_params):
    B, C, H, W = x_nchw.shape
    X = x_nchw.astype(jnp.float32).reshape(B, C, H * W)
    (W0, b0), (W1, b1), (W2, b2), (w3, b3), (w4, b4), (w5, b5) = sam_params
    A1 = jax.nn.relu(jnp.einsum('oc,bct->bot', W0, X) + b0[None, :, None])
    A2 = (jax.nn.relu(jnp.einsum('oc,bct->bot', W1, X) + b1[None, :, None])
          + jax.nn.relu(jnp.einsum('oc,bct->bot', W2, A1) + b2[None, :, None]))
    s3 = jax.nn.sigmoid(jnp.einsum('oc,bct->bot', w3, X) + b3[None, :, None])
    s4 = jax.nn.sigmoid(jnp.einsum('oc,bct->bot', w4, A1) + b4[None, :, None])
    s5 = jax.nn.sigmoid(jnp.einsum('oc,bct->bot', w5, A2) + b5[None, :, None])
    sam = X * ((s3 + s4 + s5) / 3.0)                                 # (B, C, HW)

    pooled = sam.mean(axis=2)                                        # (B, C)
    att_c = _cam_channel_att(pooled, cam_params)                     # (B, C)
    out = sam * att_c[:, :, None]
    return out.reshape(B, C, H, W)


if __name__ == "__main__":
    test_cases = [
        # ((B, C, H, W), matmul_in_bf16, tolerance)
        ((2, 4, 16, 16), False, 1e-4),     # base config, exact f32 path
        ((1, 5, 9, 7),   False, 1e-4),     # HW=63 -> exercises the zero-padded HW path
        ((1, 4, 256, 128), False, 1e-4),   # multi-tile + megacore hw-split + accumulator
        ((2, 4, 16, 16), True, 1e-2),      # bf16-matmul variant (looser tolerance)
    ]
    out = None
    for (B, C, H, W), use_bf16, tol in test_cases:
        x = jax.random.normal(jax.random.PRNGKey(0), (B, C, H, W), dtype=jnp.float32)
        sam_params, cam_params = init_params(C, seed=42)
        fwd = jax.jit(functools.partial(scam_s_forward, matmul_in_bf16=use_bf16))
        out = jax.block_until_ready(fwd(x, sam_params, cam_params))
        ref = ref_forward(x, sam_params, cam_params)
        assert out.shape == (B, C, H, W)
        assert jnp.allclose(out, ref, atol=tol, rtol=tol), (
            f"mismatch vs JAX reference for shape {(B, C, H, W)}, bf16={use_bf16}")
    print("KERNEL_OK")
</pallas_src>

<mosaic_0001>
module attributes {stable_mosaic.version = 11 : i64} {
  func.func @_sam_kernel(%arg0: i32, %arg1: i32, %arg2: i32, %arg3: memref<1x4x256xf32, #tpu.memory_space<vmem>>, %arg4: memref<65x4xf32, #tpu.memory_space<vmem>>, %arg5: memref<65x1xf32, #tpu.memory_space<vmem>>, %arg6: memref<33x32xf32, #tpu.memory_space<vmem>>, %arg7: memref<33x1xf32, #tpu.memory_space<vmem>>, %arg8: memref<32x1xf32, #tpu.memory_space<vmem>>, %arg9: memref<1xf32, #tpu.memory_space<smem>>, %arg10: memref<1x1x256xf32, #tpu.memory_space<vmem>>, %arg11: memref<1x1x4x1xf32, #tpu.memory_space<vmem>>) attributes {dimension_semantics = [#tpu.dimension_semantics<parallel>, #tpu.dimension_semantics<parallel>, #tpu.dimension_semantics<arbitrary>], iteration_bounds = array<i64: 2, 1, 1>, scalar_prefetch = 0 : i64, scratch_operands = 0 : i64, tpu.core_type = #tpu.core_type<tc>, window_params = [{transform_indices = @transform_0, window_bounds = array<i64: 1, 4, 256>}, {pipeline_mode = #tpu.pipeline_mode<synchronous>, transform_indices = @transform_1, window_bounds = array<i64: 65, 4>}, {pipeline_mode = #tpu.pipeline_mode<synchronous>, transform_indices = @transform_2, window_bounds = array<i64: 65, 1>}, {pipeline_mode = #tpu.pipeline_mode<synchronous>, transform_indices = @transform_3, window_bounds = array<i64: 33, 32>}, {pipeline_mode = #tpu.pipeline_mode<synchronous>, transform_indices = @transform_4, window_bounds = array<i64: 33, 1>}, {pipeline_mode = #tpu.pipeline_mode<synchronous>, transform_indices = @transform_5, window_bounds = array<i64: 32, 1>}, {transform_indices = @transform_6, window_bounds = array<i64: 1>}, {transform_indices = @transform_7, window_bounds = array<i64: 1, 1, 256>}, {transform_indices = @transform_8, window_bounds = array<i64: 1, 1, 4, 1>}]} {
    %c0_i32 = arith.constant 0 : i32
    %0 = arith.cmpi eq, %arg2, %c0_i32 : i32
    %1 = arith.extui %0 : i1 to i32
    %c0_i32_0 = arith.constant 0 : i32
    %2 = arith.cmpi ne, %1, %c0_i32_0 : i32
    scf.if %2 {
      %cst_36 = arith.constant 0.000000e+00 : f32
      %69 = vector.broadcast %cst_36 : f32 to vector<1x1x4x1xf32>
      %c0_37 = arith.constant 0 : index
      %c0_38 = arith.constant 0 : index
      %c0_39 = arith.constant 0 : index
      %c0_40 = arith.constant 0 : index
      %70 = vector.load %arg11[%c0_37, %c0_38, %c0_39, %c0_40] : memref<1x1x4x1xf32, #tpu.memory_space<vmem>>, vector<1x1x4x1xf32>
      tpu.vector_store %arg11[%c0_37, %c0_38, %c0_39, %c0_40], %69 {strides = array<i32>} : memref<1x1x4x1xf32, #tpu.memory_space<vmem>>, vector<1x1x4x1xf32>,
    } else {
    }
    %c0 = arith.constant 0 : index
    %c0_1 = arith.constant 0 : index
    %c0_2 = arith.constant 0 : index
    %3 = vector.load %arg3[%c0, %c0_1, %c0_2] : memref<1x4x256xf32, #tpu.memory_space<vmem>>, vector<1x4x256xf32>
    %4 = vector.shape_cast %3 : vector<1x4x256xf32> to vector<4x256xf32>
    %c0_3 = arith.constant 0 : index
    %c0_4 = arith.constant 0 : index
    %5 = vector.load %arg4[%c0_3, %c0_4] : memref<65x4xf32, #tpu.memory_space<vmem>>, vector<65x4xf32>
    %cst = arith.constant dense<0.000000e+00> : vector<65x256xf32>
    %6 = tpu.matmul %5, %4, %cst {dimension_numbers = #tpu.dot_dimension_numbers<[1], [0], [0], [1], [0, 0, 1, 1], [], []>} : vector<65x4xf32>, vector<4x256xf32>, vector<65x256xf32> -> vector<65x256xf32>
    %c0_5 = arith.constant 0 : index
    %c0_6 = arith.constant 0 : index
    %7 = vector.load %arg5[%c0_5, %c0_6] : memref<65x1xf32, #tpu.memory_space<vmem>>, vector<65x1xf32>
    %8 = vector.broadcast %7 : vector<65x1xf32> to vector<65x256xf32>
    %9 = arith.addf %6, %8 : vector<65x256xf32>
    %10 = vector.extract_strided_slice %9 {offsets = [0, 0], sizes = [32, 256], strides = [1, 1]} : vector<65x256xf32> to vector<32x256xf32>
    %cst_7 = arith.constant 0.000000e+00 : f32
    %11 = vector.broadcast %cst_7 : f32 to vector<32x256xf32>
    %12 = arith.maximumf %10, %11 : vector<32x256xf32>
    %13 = vector.extract_strided_slice %9 {offsets = [32, 0], sizes = [32, 256], strides = [1, 1]} : vector<65x256xf32> to vector<32x256xf32>
    %cst_8 = arith.constant 0.000000e+00 : f32
    %14 = vector.broadcast %cst_8 : f32 to vector<32x256xf32>
    %15 = arith.maximumf %13, %14 : vector<32x256xf32>
    %16 = vector.extract_strided_slice %9 {offsets = [64, 0], sizes = [1, 256], strides = [1, 1]} : vector<65x256xf32> to vector<1x256xf32>
    %17 = arith.negf %16 : vector<1x256xf32>
    %18 = math.exp %17 : vector<1x256xf32>
    %cst_9 = arith.constant 1.000000e+00 : f32
    %19 = vector.broadcast %cst_9 : f32 to vector<1x256xf32>
    %20 = arith.addf %19, %18 : vector<1x256xf32>
    %21 = arith.divf %19, %20 : vector<1x256xf32>
    %c0_10 = arith.constant 0 : index
    %c0_11 = arith.constant 0 : index
    %22 = vector.load %arg6[%c0_10, %c0_11] : memref<33x32xf32, #tpu.memory_space<vmem>>, vector<33x32xf32>
    %cst_12 = arith.constant dense<0.000000e+00> : vector<33x256xf32>
    %23 = tpu.matmul %22, %12, %cst_12 {dimension_numbers = #tpu.dot_dimension_numbers<[1], [0], [0], [1], [0, 0, 1, 1], [], []>} : vector<33x32xf32>, vector<32x256xf32>, vector<33x256xf32> -> vector<33x256xf32>
    %c0_13 = arith.constant 0 : index
    %c0_14 = arith.constant 0 : index
    %24 = vector.load %arg7[%c0_13, %c0_14] : memref<33x1xf32, #tpu.memory_space<vmem>>, vector<33x1xf32>
    %25 = vector.broadcast %24 : vector<33x1xf32> to vector<33x256xf32>
    %26 = arith.addf %23, %25 : vector<33x256xf32>
    %27 = vector.extract_strided_slice %26 {offsets = [0, 0], sizes = [32, 256], strides = [1, 1]} : vector<33x256xf32> to vector<32x256xf32>
    %cst_15 = arith.constant 0.000000e+00 : f32
    %28 = vector.broadcast %cst_15 : f32 to vector<32x256xf32>
    %29 = arith.maximumf %27, %28 : vector<32x256xf32>
    %30 = arith.addf %15, %29 : vector<32x256xf32>
    %31 = vector.extract_strided_slice %26 {offsets = [32, 0], sizes = [1, 256], strides = [1, 1]} : vector<33x256xf32> to vector<1x256xf32>
    %32 = arith.negf %31 : vector<1x256xf32>
    %33 = math.exp %32 : vector<1x256xf32>
    %cst_16 = arith.constant 1.000000e+00 : f32
    %34 = vector.broadcast %cst_16 : f32 to vector<1x256xf32>
    %35 = arith.addf %34, %33 : vector<1x256xf32>
    %36 = arith.divf %34, %35 : vector<1x256xf32>
    %c0_17 = arith.constant 0 : index
    %c0_18 = arith.constant 0 : index
    %37 = vector.load %arg8[%c0_17, %c0_18] : memref<32x1xf32, #tpu.memory_space<vmem>>, vector<32x1xf32>
    %38 = vector.broadcast %37 : vector<32x1xf32> to vector<32x256xf32>
    %39 = arith.mulf %30, %38 : vector<32x256xf32>
    %cst_19 = arith.constant dense<0.000000e+00> : vector<256xf32>
    %40 = vector.multi_reduction <add>, %39, %cst_19 [0] : vector<32x256xf32> to vector<256xf32>
    %41 = vector.shape_cast %40 : vector<256xf32> to vector<1x256xf32>
    %c0_20 = arith.constant 0 : index
    %42 = memref.load %arg9[%c0_20] : memref<1xf32, #tpu.memory_space<smem>>
    %43 = vector.broadcast %42 : f32 to vector<1x256xf32>
    %44 = arith.addf %41, %43 : vector<1x256xf32>
    %45 = arith.negf %44 : vector<1x256xf32>
    %46 = math.exp %45 : vector<1x256xf32>
    %cst_21 = arith.constant 1.000000e+00 : f32
    %47 = vector.broadcast %cst_21 : f32 to vector<1x256xf32>
    %48 = arith.addf %47, %46 : vector<1x256xf32>
    %49 = arith.divf %47, %48 : vector<1x256xf32>
    %50 = arith.addf %21, %36 : vector<1x256xf32>
    %51 = arith.addf %50, %49 : vector<1x256xf32>
    %cst_22 = arith.constant 0.333333343 : f32
    %52 = vector.broadcast %cst_22 : f32 to vector<1x256xf32>
    %53 = arith.mulf %51, %52 : vector<1x256xf32>
    %c0_23 = arith.constant 0 : index
    %c0_24 = arith.constant 0 : index
    %c0_25 = arith.constant 0 : index
    %54 = vector.load %arg10[%c0_23, %c0_24, %c0_25] : memref<1x1x256xf32, #tpu.memory_space<vmem>>, vector<1x1x256xf32>
    %55 = vector.shape_cast %54 : vector<1x1x256xf32> to vector<1x256xf32>
    %56 = vector.shape_cast %53 : vector<1x256xf32> to vector<1x1x256xf32>
    tpu.vector_store %arg10[%c0_23, %c0_24, %c0_25], %56 {strides = array<i32>} : memref<1x1x256xf32, #tpu.memory_space<vmem>>, vector<1x1x256xf32>,
    %c0_26 = arith.constant 0 : index
    %c0_27 = arith.constant 0 : index
    %c0_28 = arith.constant 0 : index
    %c0_29 = arith.constant 0 : index
    %57 = vector.load %arg11[%c0_26, %c0_27, %c0_28, %c0_29] : memref<1x1x4x1xf32, #tpu.memory_space<vmem>>, vector<1x1x4x1xf32>
    %58 = vector.shape_cast %57 : vector<1x1x4x1xf32> to vector<4x1xf32>
    %59 = vector.broadcast %53 : vector<1x256xf32> to vector<4x256xf32>
    %60 = arith.mulf %4, %59 : vector<4x256xf32>
    %cst_30 = arith.constant dense<0.000000e+00> : vector<4xf32>
    %61 = vector.multi_reduction <add>, %60, %cst_30 [1] : vector<4x256xf32> to vector<4xf32>
    %62 = vector.shape_cast %61 : vector<4xf32> to vector<4x1xf32>
    %cst_31 = arith.constant 3.906250e-03 : f32
    %63 = vector.broadcast %cst_31 : f32 to vector<4x1xf32>
    %64 = arith.mulf %62, %63 : vector<4x1xf32>
    %65 = arith.addf %58, %64 : vector<4x1xf32>
    %c0_32 = arith.constant 0 : index
    %c0_33 = arith.constant 0 : index
    %c0_34 = arith.constant 0 : index
    %c0_35 = arith.constant 0 : index
    %66 = vector.load %arg11[%c0_32, %c0_33, %c0_34, %c0_35] : memref<1x1x4x1xf32, #tpu.memory_space<vmem>>, vector<1x1x4x1xf32>
    %67 = vector.shape_cast %66 : vector<1x1x4x1xf32> to vector<4x1xf32>
    %68 = vector.shape_cast %65 : vector<4x1xf32> to vector<1x1x4x1xf32>
    tpu.vector_store %arg11[%c0_32, %c0_33, %c0_34, %c0_35], %68 {strides = array<i32>} : memref<1x1x4x1xf32, #tpu.memory_space<vmem>>, vector<1x1x4x1xf32>,
    return
  }
  func.func @transform_0(%arg0: i32, %arg1: i32, %arg2: i32) -> (i32, i32, i32) {
    %c1_i32 = arith.constant 1 : i32
    %0 = arith.muli %arg1, %c1_i32 : i32
    %1 = arith.addi %0, %arg2 : i32
    %c0_i32 = arith.constant 0 : i32
    %c0_i32_0 = arith.constant 0 : i32
    return %arg0, %c0_i32, %1 : i32, i32, i32
  }
  func.func @transform_1(%arg0: i32, %arg1: i32, %arg2: i32) -> (i32, i32) {
    %c0_i32 = arith.constant 0 : i32
    %c0_i32_0 = arith.constant 0 : i32
    %c0_i32_1 = arith.constant 0 : i32
    return %c0_i32, %c0_i32_0 : i32, i32
  }
  func.func @transform_2(%arg0: i32, %arg1: i32, %arg2: i32) -> (i32, i32) {
    %c0_i32 = arith.constant 0 : i32
    %c0_i32_0 = arith.constant 0 : i32
    %c0_i32_1 = arith.constant 0 : i32
    return %c0_i32, %c0_i32_0 : i32, i32
  }
  func.func @transform_3(%arg0: i32, %arg1: i32, %arg2: i32) -> (i32, i32) {
    %c0_i32 = arith.constant 0 : i32
    %c0_i32_0 = arith.constant 0 : i32
    %c0_i32_1 = arith.constant 0 : i32
    return %c0_i32, %c0_i32_0 : i32, i32
  }
  func.func @transform_4(%arg0: i32, %arg1: i32, %arg2: i32) -> (i32, i32) {
    %c0_i32 = arith.constant 0 : i32
    %c0_i32_0 = arith.constant 0 : i32
    %c0_i32_1 = arith.constant 0 : i32
    return %c0_i32, %c0_i32_0 : i32, i32
  }
  func.func @transform_5(%arg0: i32, %arg1: i32, %arg2: i32) -> (i32, i32) {
    %c0_i32 = arith.constant 0 : i32
    %c0_i32_0 = arith.constant 0 : i32
    %c0_i32_1 = arith.constant 0 : i32
    return %c0_i32, %c0_i32_0 : i32, i32
  }
  func.func @transform_6(%arg0: i32, %arg1: i32, %arg2: i32) -> i32 {
    %c0_i32 = arith.constant 0 : i32
    %c0_i32_0 = arith.constant 0 : i32
    return %c0_i32 : i32
  }
  func.func @transform_7(%arg0: i32, %arg1: i32, %arg2: i32) -> (i32, i32, i32) {
    %c1_i32 = arith.constant 1 : i32
    %0 = arith.muli %arg1, %c1_i32 : i32
    %1 = arith.addi %0, %arg2 : i32
    %c0_i32 = arith.constant 0 : i32
    %c0_i32_0 = arith.constant 0 : i32
    return %arg0, %c0_i32, %1 : i32, i32, i32
  }
  func.func @transform_8(%arg0: i32, %arg1: i32, %arg2: i32) -> (i32, i32, i32, i32) {
    %c0_i32 = arith.constant 0 : i32
    %c0_i32_0 = arith.constant 0 : i32
    %c0_i32_1 = arith.constant 0 : i32
    return %arg0, %arg1, %c0_i32, %c0_i32_0 : i32, i32, i32, i32
  }
}

module attributes {stable_mosaic.version = 11 : i64} {
  func.func @_scale_kernel(%arg0: i32, %arg1: i32, %arg2: memref<1x4x256xf32, #tpu.memory_space<vmem>>, %arg3: memref<1x1x256xf32, #tpu.memory_space<vmem>>, %arg4: memref<1x4x1xf32, #tpu.memory_space<vmem>>, %arg5: memref<1x4x256xf32, #tpu.memory_space<vmem>>) attributes {dimension_semantics = [#tpu.dimension_semantics<parallel>, #tpu.dimension_semantics<parallel>], iteration_bounds = array<i64: 2, 1>, scalar_prefetch = 0 : i64, scratch_operands = 0 : i64, tpu.core_type = #tpu.core_type<tc>, window_params = [{transform_indices = @transform_0, window_bounds = array<i64: 1, 4, 256>}, {transform_indices = @transform_1, window_bounds = array<i64: 1, 1, 256>}, {transform_indices = @transform_2, window_bounds = array<i64: 1, 4, 1>}, {transform_indices = @transform_3, window_bounds = array<i64: 1, 4, 256>}]} {
    %c0 = arith.constant 0 : index
    %c0_0 = arith.constant 0 : index
    %c0_1 = arith.constant 0 : index
    %0 = vector.load %arg2[%c0, %c0_0, %c0_1] : memref<1x4x256xf32, #tpu.memory_space<vmem>>, vector<1x4x256xf32>
    %1 = vector.shape_cast %0 : vector<1x4x256xf32> to vector<4x256xf32>
    %c0_2 = arith.constant 0 : index
    %c0_3 = arith.constant 0 : index
    %c0_4 = arith.constant 0 : index
    %2 = vector.load %arg3[%c0_2, %c0_3, %c0_4] : memref<1x1x256xf32, #tpu.memory_space<vmem>>, vector<1x1x256xf32>
    %3 = vector.shape_cast %2 : vector<1x1x256xf32> to vector<1x256xf32>
    %4 = vector.broadcast %3 : vector<1x256xf32> to vector<4x256xf32>
    %5 = arith.mulf %1, %4 : vector<4x256xf32>
    %c0_5 = arith.constant 0 : index
    %c0_6 = arith.constant 0 : index
    %c0_7 = arith.constant 0 : index
    %6 = vector.load %arg4[%c0_5, %c0_6, %c0_7] : memref<1x4x1xf32, #tpu.memory_space<vmem>>, vector<1x4x1xf32>
    %7 = vector.shape_cast %6 : vector<1x4x1xf32> to vector<4x1xf32>
    %8 = vector.broadcast %7 : vector<4x1xf32> to vector<4x256xf32>
    %9 = arith.mulf %5, %8 : vector<4x256xf32>
    %c0_8 = arith.constant 0 : index
    %c0_9 = arith.constant 0 : index
    %c0_10 = arith.constant 0 : index
    %10 = vector.load %arg5[%c0_8, %c0_9, %c0_10] : memref<1x4x256xf32, #tpu.memory_space<vmem>>, vector<1x4x256xf32>
    %11 = vector.shape_cast %10 : vector<1x4x256xf32> to vector<4x256xf32>
    %12 = vector.shape_cast %9 : vector<4x256xf32> to vector<1x4x256xf32>
    tpu.vector_store %arg5[%c0_8, %c0_9, %c0_10], %12 {strides = array<i32>} : memref<1x4x256xf32, #tpu.memory_space<vmem>>, vector<1x4x256xf32>,
    return
  }
  func.func @transform_0(%arg0: i32, %arg1: i32) -> (i32, i32, i32) {
    %c0_i32 = arith.constant 0 : i32
    %c0_i32_0 = arith.constant 0 : i32
    return %arg0, %c0_i32, %arg1 : i32, i32, i32
  }
  func.func @transform_1(%arg0: i32, %arg1: i32) -> (i32, i32, i32) {
    %c0_i32 = arith.constant 0 : i32
    %c0_i32_0 = arith.constant 0 : i32
    return %arg0, %c0_i32, %arg1 : i32, i32, i32
  }
  func.func @transform_2(%arg0: i32, %arg1: i32) -> (i32, i32, i32) {
    %c0_i32 = arith.constant 0 : i32
    %c0_i32_0 = arith.constant 0 : i32
    %c0_i32_1 = arith.constant 0 : i32
    return %arg0, %c0_i32, %c0_i32_0 : i32, i32, i32
  }
  func.func @transform_3(%arg0: i32, %arg1: i32) -> (i32, i32, i32) {
    %c0_i32 = arith.constant 0 : i32
    %c0_i32_0 = arith.constant 0 : i32
    return %arg0, %c0_i32, %arg1 : i32, i32, i32
  }
}

</mosaic_0001>

<llo_original>
// kernel: scam_s_forward.3
$region0: #{scam_s_forward.3}
  #allocation0 [shape = 'u32[]', space=smem, size = 0x4, offset = 0x4, fixed_abs, tag = 'smem constant byte address 0x4 - core index']
  #allocation1 [shape = 'u32[72,128]{1,0:T(1,128)}', space=vmem, size = 0x9000, scoped, tag = 'internal scratch']
  %s0 = inlined_call_operand.vmem [shape: f32[2,4,256], index: 0, kind: input, shape index: {}]
  %s1 = inlined_call_operand.vmem [shape: f32[2,1,256], index: 1, kind: input, shape index: {}]
  %s2 = inlined_call_operand.vmem [shape: f32[2,4,1], index: 2, kind: input, shape index: {}]
  %s3 = inlined_call_operand.vmem [shape: f32[2,4,256], index: 3, kind: output, shape index: {}]
  %s4 = sld [smem:[#allocation0]]
  $region45: #{scam_s_forward.3} parent=0
    _
  %s6 = ssub.s32 1, %s4
  %s7 = scalar_select 0, %s6, %s4
  loop: start=0, step=1, limit=4
  $region2: #{scam_s_forward.3} parent=0 // loop_pre_header
    _
  $region3: #{scam_s_forward.3} parent=0 // loop_header
    %s9 = sphi 0, %s13
    %p10 = scmp.ge.s32.totalorder %s9, 4
    %s16 = sphi 0, %s28
    %s17 = sphi 0, %s24
    %s18 = sphi 0, %s16
    %s19 = sphi 0, %s17
    %s20 = sphi 0, %s18
    %s21 = sphi 0, %s19
    %s33 = sphi 0, %s35
    %s36 = sphi 0, %s33
    %s37 = sphi 0, %s36
    %s53 = sphi 0, %s37
    %s61 = sphi 0, %s63
    %s64 = sphi 0, %s61
    %s65 = sphi 0, %s64
    %s81 = sphi 0, %s65
    %s87 = sphi 0, %s89
    %s90 = sphi 0, %s87
    %s91 = sphi 0, %s90
    %s107 = sphi 0, %s91
    %s115 = sphi 0, %s117
    %s118 = sphi 0, %s115
    %s119 = sphi 0, %s118
    %s135 = sphi 0, %s119
  $region4: #{scam_s_forward.3} parent=0 // loop_header_branch
    %12 = sbr.rel (%p10) target = $region8
  $region5: #{scam_s_forward.3} parent=0 // loop_body
    %s14 = ssub.s32 %s9, 1
    %s15 = ssub.s32 %s9, 2
    %s22 = sadd.s32 1, %s17
    %p23 = scmp.ge.s32.totalorder %s22, 1
    %s24 = scalar_select %p23, 0, %s22
    %s25 = sadd.s32 1, %s16
    %s26 = scalar_select %p23, %s25, %s16
    %p27 = scmp.ge.s32.totalorder %s26, 2
    %s28 = scalar_select %p27, 0, %s26
    %s29 = ssub.s32 %s16, %s28
    %s30 = ssub.s32 %s17, %s24
    %s31 = sor.u32 %s29, %s30
    %p32 = scmp.eq.s32.totalorder %s31, 0
    %s34 = sadd.s32 %s33, 1
    %s35 = scalar_select %p32, %s33, %s34
    %p38 = pneg %p32
    %p39 = scmp.eq.s32.totalorder %s9, 1
    %p40 = por %p38, %p39
    %p41 = scmp.ne.s32.totalorder %s33, %s36
    %p42 = scmp.eq.s32.totalorder %s9, 0
    %p43 = por %p41, %p42
    %p44 = scmp.ne.s32.totalorder %s33, %s36
    %p45 = scmp.eq.s32.totalorder %s14, 1
    %p46 = por %p44, %p45
    %p47 = scmp.ne.s32.totalorder %s36, %s37
    %p48 = scmp.eq.s32.totalorder %s14, 0
    %p49 = por %p47, %p48
    %p50 = scmp.ne.s32.totalorder %s36, %s37
    %p51 = scmp.eq.s32.totalorder %s15, 1
    %p52 = por %p50, %p51
    %p54 = scmp.ne.s32.totalorder %s37, %s53
    %p55 = scmp.eq.s32.totalorder %s15, 0
    %p56 = por %p54, %p55
    %s57 = ssub.s32 %s16, %s28
    %s58 = ssub.s32 %s17, %s24
    %s59 = sor.u32 %s57, %s58
    %p60 = scmp.eq.s32.totalorder %s59, 0
    %s62 = sadd.s32 %s61, 1
    %s63 = scalar_select %p60, %s61, %s62
    %p66 = pneg %p60
    %p67 = scmp.eq.s32.totalorder %s9, 1
    %p68 = por %p66, %p67
    %p69 = scmp.ne.s32.totalorder %s61, %s64
    %p70 = scmp.eq.s32.totalorder %s9, 0
    %p71 = por %p69, %p70
    %p72 = scmp.ne.s32.totalorder %s61, %s64
    %p73 = scmp.eq.s32.totalorder %s14, 1
    %p74 = por %p72, %p73
    %p75 = scmp.ne.s32.totalorder %s64, %s65
    %p76 = scmp.eq.s32.totalorder %s14, 0
    %p77 = por %p75, %p76
    %p78 = scmp.ne.s32.totalorder %s64, %s65
    %p79 = scmp.eq.s32.totalorder %s15, 1
    %p80 = por %p78, %p79
    %p82 = scmp.ne.s32.totalorder %s65, %s81
    %p83 = scmp.eq.s32.totalorder %s15, 0
    %p84 = por %p82, %p83
    %s85 = ssub.s32 %s16, %s28
    %p86 = scmp.eq.s32.totalorder %s85, 0
    %s88 = sadd.s32 %s87, 1
    %s89 = scalar_select %p86, %s87, %s88
    %p92 = pneg %p86
    %p93 = scmp.eq.s32.totalorder %s9, 1
    %p94 = por %p92, %p93
    %p95 = scmp.ne.s32.totalorder %s87, %s90
    %p96 = scmp.eq.s32.totalorder %s9, 0
    %p97 = por %p95, %p96
    %p98 = scmp.ne.s32.totalorder %s87, %s90
    %p99 = scmp.eq.s32.totalorder %s14, 1
    %p100 = por %p98, %p99
    %p101 = scmp.ne.s32.totalorder %s90, %s91
    %p102 = scmp.eq.s32.totalorder %s14, 0
    %p103 = por %p101, %p102
    %p104 = scmp.ne.s32.totalorder %s90, %s91
    %p105 = scmp.eq.s32.totalorder %s15, 1
    %p106 = por %p104, %p105
    %p108 = scmp.ne.s32.totalorder %s91, %s107
    %p109 = scmp.eq.s32.totalorder %s15, 0
    %p110 = por %p108, %p109
    %s111 = ssub.s32 %s16, %s28
    %s112 = ssub.s32 %s17, %s24
    %s113 = sor.u32 %s111, %s112
    %p114 = scmp.eq.s32.totalorder %s113, 0
    %s116 = sadd.s32 %s115, 1
    %s117 = scalar_select %p114, %s115, %s116
    %p120 = pneg %p114
    %p121 = scmp.eq.s32.totalorder %s9, 1
    %p122 = por %p120, %p121
    %p123 = scmp.ne.s32.totalorder %s115, %s118
    %p124 = scmp.eq.s32.totalorder %s9, 0
    %p125 = por %p123, %p124
    %p126 = scmp.ne.s32.totalorder %s115, %s118
    %p127 = scmp.eq.s32.totalorder %s14, 1
    %p128 = por %p126, %p127
    %p129 = scmp.ne.s32.totalorder %s118, %s119
    %p130 = scmp.eq.s32.totalorder %s14, 0
    %p131 = por %p129, %p130
    %p132 = scmp.ne.s32.totalorder %s118, %s119
    %p133 = scmp.eq.s32.totalorder %s15, 1
    %p134 = por %p132, %p133
    %p136 = scmp.ne.s32.totalorder %s119, %s135
    %p137 = scmp.eq.s32.totalorder %s15, 0
    %p138 = por %p136, %p137
    %p139 = scmp.le.s32.totalorder 1, %s9
    %p140 = scmp.lt.s32.totalorder %s9, 3
    %p141 = pnand %p139, %p140
    %p142 = pneg %p141
    // Predicated region
    $region9: #{scam_s_forward.3} parent=5 // pred_check
      _
    $region10: #{scam_s_forward.3} parent=5 // pred_check_branch
      %144 = sbr.rel (%p141) target = $region12
    $region11: #{scam_s_forward.3} parent=5 // pred_region
      %s145 = ssub.s32 %s9, 1
    $region12: #{scam_s_forward.3} parent=5 // pred_fallthru
      _
    %p146 = scmp.lt.s32.totalorder %s9, 2
    // Predicated region
    $region13: #{scam_s_forward.3} parent=5 // pred_check
      %p147 = pneg %p146
    $region14: #{scam_s_forward.3} parent=5 // pred_check_branch
      %149 = sbr.rel (%p147) target = $region16
    $region15: #{scam_s_forward.3} parent=5 // pred_region
      // Predicated region
      $region17: #{scam_s_forward.3} parent=15 // pred_check
        %p150 = pneg %p43
      $region18: #{scam_s_forward.3} parent=15 // pred_check_branch
        %152 = sbr.rel (%p150) target = $region20
      $region19: #{scam_s_forward.3} parent=15 // pred_region
        %s153 = smul.u32 2, %s17
        %p154 = scmp.lt.s32.totalorder %s16, 1
        %s155 = scalar_select %p154, %s16, 1
        %p156 = scmp.lt.s32.totalorder %s153, 1
        %s157 = scalar_select %p156, %s153, 1
        %s158 = smul.addr %s155, 2
        %s159 = sadd.s32 %s157, %s158
        %s160 = smul.addr %s159, 4
        %s161 = scalar_lea.vmem %s0, %s160
        %s162 = smul.u32 2, %s17
      $region20: #{scam_s_forward.3} parent=15 // pred_fallthru
        _
      // Predicated region
      $region21: #{scam_s_forward.3} parent=15 // pred_check
        %p163 = pneg %p71
      $region22: #{scam_s_forward.3} parent=15 // pred_check_branch
        %165 = sbr.rel (%p163) target = $region24
      $region23: #{scam_s_forward.3} parent=15 // pred_region
        %s166 = smul.u32 2, %s17
        %p167 = scmp.lt.s32.totalorder %s16, 1
        %s168 = scalar_select %p167, %s16, 1
        %p169 = scmp.lt.s32.totalorder %s166, 1
        %s170 = scalar_select %p169, %s166, 1
        %s171 = smul.addr %s168, 2
        %s172 = sadd.s32 %s170, %s171
        %s173 = scalar_lea.vmem %s1, %s172
        %s174 = smul.u32 2, %s17
      $region24: #{scam_s_forward.3} parent=15 // pred_fallthru
        _
      // Predicated region
      $region25: #{scam_s_forward.3} parent=15 // pred_check
        %p175 = pneg %p97
      $region26: #{scam_s_forward.3} parent=15 // pred_check_branch
        %177 = sbr.rel (%p175) target = $region28
      $region27: #{scam_s_forward.3} parent=15 // pred_region
        %p178 = scmp.lt.s32.totalorder %s16, 1
        %s179 = scalar_select %p178, %s16, 1
        %s180 = smul.addr %s179, 4
        %s181 = scalar_lea.vmem %s2, %s180
      $region28: #{scam_s_forward.3} parent=15 // pred_fallthru
        _
    $region16: #{scam_s_forward.3} parent=5 // pred_fallthru
      _
    %p182 = scmp.le.s32.totalorder 1, %s9
    %p183 = scmp.lt.s32.totalorder %s9, 3
    %p184 = pnand %p182, %p183
    %p185 = pneg %p184
    // Predicated region
    $region29: #{scam_s_forward.3} parent=5 // pred_check
      _
    $region30: #{scam_s_forward.3} parent=5 // pred_check_branch
      %187 = sbr.rel (%p184) target = $region32
    $region31: #{scam_s_forward.3} parent=5 // pred_region
      %s188 = ssub.s32 %s9, 1
      %s189 = smul.u32 2, %s19
      %p190 = scmp.lt.s32.totalorder %s18, 1
      %s191 = scalar_select %p190, %s18, 1
      %p192 = scmp.lt.s32.totalorder %s189, 1
      %s193 = scalar_select %p192, %s189, 1
      %s194 = smul.addr %s191, 2
      %s195 = sadd.s32 %s193, %s194
      %s196 = smul.addr %s195, 4
      %s197 = scalar_lea.vmem %s0, %s196
      %p198 = pneg %p49
      %p199 = pneg %p46
      %s200 = smul.u32 2, %s19
      %p201 = scmp.lt.s32.totalorder %s18, 1
      %s202 = scalar_select %p201, %s18, 1
      %p203 = scmp.lt.s32.totalorder %s200, 1
      %s204 = scalar_select %p203, %s200, 1
      %s205 = smul.addr %s202, 2
      %s206 = sadd.s32 %s204, %s205
      %s207 = scalar_lea.vmem %s1, %s206
      %p208 = pneg %p77
      %p209 = pneg %p74
      %p210 = scmp.lt.s32.totalorder %s18, 1
      %s211 = scalar_select %p210, %s18, 1
      %s212 = smul.addr %s211, 4
      %s213 = scalar_lea.vmem %s2, %s212
      %p214 = pneg %p103
      %p215 = pneg %p100
      %p216 = pneg %p131
      %p217 = pneg %p128
      %s218 = smul.u32 2, %s19
      %p219 = scmp.lt.s32.totalorder %s18, 1
      %s220 = scalar_select %p219, %s18, 1
      %p221 = scmp.lt.s32.totalorder %s218, 1
      %s222 = scalar_select %p221, %s218, 1
      %s223 = smul.addr %s220, 2
      %s224 = sadd.s32 %s222, %s223
      %s225 = smul.addr %s224, 4
      %s226 = scalar_lea.vmem %s3, %s225
      %s227 = smul.u32 2, %s19
      %p228 = scmp.lt.s32.totalorder %s18, 1
      %s229 = scalar_select %p228, %s18, 1
      %p230 = scmp.lt.s32.totalorder %s227, 1
      %s231 = scalar_select %p230, %s227, 1
      %s232 = smul.addr %s229, 2
      %s233 = sadd.s32 %s231, %s232
      %s234 = smul.addr %s233, 4
      %s235 = scalar_lea.vmem %s0, %s234
      %s236 = smul.u32 2, %s19
      %s237 = smul.u32 2, %s19
      %p238 = scmp.lt.s32.totalorder %s18, 1
      %s239 = scalar_select %p238, %s18, 1
      %p240 = scmp.lt.s32.totalorder %s237, 1
      %s241 = scalar_select %p240, %s237, 1
      %s242 = smul.addr %s239, 2
      %s243 = sadd.s32 %s241, %s242
      %s244 = scalar_lea.vmem %s1, %s243
      %s245 = smul.u32 2, %s19
      %p246 = scmp.lt.s32.totalorder %s18, 1
      %s247 = scalar_select %p246, %s18, 1
      %s248 = smul.addr %s247, 4
      %s249 = scalar_lea.vmem %s2, %s248
      %s250 = smul.u32 2, %s19
      %p251 = scmp.lt.s32.totalorder %s18, 1
      %s252 = scalar_select %p251, %s18, 1
      %p253 = scmp.lt.s32.totalorder %s250, 1
      %s254 = scalar_select %p253, %s250, 1
      %s255 = smul.addr %s252, 2
      %s256 = sadd.s32 %s254, %s255
      %s257 = smul.addr %s256, 4
      %s258 = scalar_lea.vmem %s3, %s257
      %s259 = smul.u32 2, %s19
      %v260 = vld [vmem:[%s235] sm:$0xff]
      %v261 = vld [vmem:[%s244] sm:$0x3]
      %v263 = vperm.slane %v261, 0
      %v264 = vperm.slane %v261, 1
      %v265 = vrot.slane %v264, 4
      %vm266 = vcmask 1043456
      %v267 = vsel %vm266, %v263, %v265
      %v269 = vmul.f32 %v260, %v267
      %v270 = vld [vmem:[%s249] sm:$0xf]
      %272 = vset.pattern.permute.xlu0 0
      %273 = vperm.xlu0 %272, %v270
      %v274 = vpop.permute.xlu0 %273
      %v276 = vunpack.c.l.s4 839922192
      %v277 = vunpack.c.0.s8 %v276
      %v278 = vperm.slane %v274, %v277
      %v280 = vmul.f32 %v269, %v278
      %281 = vst [vmem:[%s258] sm:$0xff] %v280
      %s282 = smul.u32 2, %s19
      %p283 = scmp.lt.s32.totalorder %s18, 1
      %s284 = scalar_select %p283, %s18, 1
      %p285 = scmp.lt.s32.totalorder %s282, 1
      %s286 = scalar_select %p285, %s282, 1
      %s287 = smul.addr %s284, 2
      %s288 = sadd.s32 %s286, %s287
      %s289 = smul.addr %s288, 4
      %s290 = scalar_lea.vmem %s3, %s289
      // Predicated region
      $region33: #{scam_s_forward.3} parent=31 // pred_check
        %p291 = pneg %p128
      $region34: #{scam_s_forward.3} parent=31 // pred_check_branch
        %293 = sbr.rel (%p291) target = $region36
      $region35: #{scam_s_forward.3} parent=31 // pred_region
        %s294 = smul.u32 2, %s19
      $region36: #{scam_s_forward.3} parent=31 // pred_fallthru
        _
    $region32: #{scam_s_forward.3} parent=5 // pred_fallthru
      _
    %p295 = scmp.le.s32.totalorder 2, %s9
    // Predicated region
    $region37: #{scam_s_forward.3} parent=5 // pred_check
      %p296 = pneg %p295
    $region38: #{scam_s_forward.3} parent=5 // pred_check_branch
      %298 = sbr.rel (%p296) target = $region40
    $region39: #{scam_s_forward.3} parent=5 // pred_region
      %s299 = ssub.s32 %s9, 2
      // Predicated region
      $region41: #{scam_s_forward.3} parent=39 // pred_check
        %p300 = pneg %p134
      $region42: #{scam_s_forward.3} parent=39 // pred_check_branch
        %302 = sbr.rel (%p300) target = $region44
      $region43: #{scam_s_forward.3} parent=39 // pred_region
        %s303 = smul.u32 2, %s21
        %p304 = scmp.lt.s32.totalorder %s20, 1
        %s305 = scalar_select %p304, %s20, 1
        %p306 = scmp.lt.s32.totalorder %s303, 1
        %s307 = scalar_select %p306, %s303, 1
        %s308 = smul.addr %s305, 2
        %s309 = sadd.s32 %s307, %s308
        %s310 = smul.addr %s309, 4
        %s311 = scalar_lea.vmem %s3, %s310
      $region44: #{scam_s_forward.3} parent=39 // pred_fallthru
        _
    $region40: #{scam_s_forward.3} parent=5 // pred_fallthru
      _
  $region6: #{scam_s_forward.3} parent=0 // loop_footer
    %s13 = sadd.s32 1, %s9
  $region7: #{scam_s_forward.3} parent=0 // loop_footer_branch
    %8 = sbr.rel target = $region3
  $region8: #{scam_s_forward.3} parent=0 // loop_exit
    _

// kernel: scam_s_forward.2
$region0: #{scam_s_forward.2}
  #allocation0 [shape = 'u32[]', space=smem, size = 0x4, offset = 0x4, fixed_abs, tag = 'smem constant byte address 0x4 - core index']
  #allocation1 [shape = 'u32[72,128]{1,0:T(1,128)}', space=vmem, size = 0x9000, scoped, tag = 'internal scratch']
  #allocation2 [shape = 'f32[1]{0:T(128)S(6)}', space=smem, size = 0x200, scoped, tag = 'scoped memory for scam_s_forward.2']
  %s0 = inlined_call_operand.vmem [shape: f32[2,4,256], index: 0, kind: input, shape index: {}]
  %s1 = inlined_call_operand.vmem [shape: f32[65,4], index: 1, kind: input, shape index: {}]
  %s2 = inlined_call_operand.vmem [shape: f32[65,1], index: 2, kind: input, shape index: {}]
  %s3 = inlined_call_operand.vmem [shape: f32[33,32], index: 3, kind: input, shape index: {}]
  %s4 = inlined_call_operand.vmem [shape: f32[33,1], index: 4, kind: input, shape index: {}]
  %s5 = inlined_call_operand.vmem [shape: f32[32,1], index: 5, kind: input, shape index: {}]
  %s6 = inlined_call_operand.<no memory space> [shape: f32[1], index: 6, kind: input, shape index: {}]
  %s7 = inlined_call_operand.vmem [shape: f32[2,1,256], index: 7, kind: output, shape index: {0}]
  %s8 = inlined_call_operand.vmem [shape: f32[2,1,4,1], index: 8, kind: output, shape index: {1}]
  %9 = xla_tuple %s7, %s8
  %s10 = sld [smem:[#allocation0]]
  $region73: #{scam_s_forward.2} parent=0
    _
  %s12 = ssub.s32 1, %s10
  %s13 = scalar_select 0, %s12, %s10
  %14 = sst [smem:[#allocation2]] %s6
  loop: start=0, step=1, limit=4
  $region2: #{scam_s_forward.2} parent=0 // loop_pre_header
    _
  $region3: #{scam_s_forward.2} parent=0 // loop_header
    %s16 = sphi 0, %s20
    %p17 = scmp.ge.s32.totalorder %s16, 4
    %s23 = sphi 0, %s42
    %s24 = sphi 0, %s38
    %s25 = sphi 0, %s34
    %s26 = sphi 0, %s23
    %s27 = sphi 0, %s24
    %s28 = sphi 0, %s25
    %s29 = sphi 0, %s26
    %s30 = sphi 0, %s27
    %s31 = sphi 0, %s28
    %s49 = sphi 0, %s51
    %s52 = sphi 0, %s49
    %s53 = sphi 0, %s52
    %s69 = sphi 0, %s53
    %s73 = sphi 0, %s73
    %s75 = sphi 0, %s73
    %s76 = sphi 0, %s75
    %s90 = sphi 0, %s76
    %s94 = sphi 0, %s94
    %s96 = sphi 0, %s94
    %s97 = sphi 0, %s96
    %s111 = sphi 0, %s97
    %s115 = sphi 0, %s115
    %s117 = sphi 0, %s115
    %s118 = sphi 0, %s117
    %s132 = sphi 0, %s118
    %s136 = sphi 0, %s136
    %s138 = sphi 0, %s136
    %s139 = sphi 0, %s138
    %s153 = sphi 0, %s139
    %s157 = sphi 0, %s157
    %s159 = sphi 0, %s157
    %s160 = sphi 0, %s159
    %s174 = sphi 0, %s160
    %s178 = sphi 0, %s178
    %s180 = sphi 0, %s178
    %s181 = sphi 0, %s180
    %s195 = sphi 0, %s181
    %s205 = sphi 0, %s207
    %s208 = sphi 0, %s205
    %s209 = sphi 0, %s208
    %s225 = sphi 0, %s209
    %s233 = sphi 0, %s235
    %s236 = sphi 0, %s233
    %s237 = sphi 0, %s236
    %s253 = sphi 0, %s237
  $region4: #{scam_s_forward.2} parent=0 // loop_header_branch
    %19 = sbr.rel (%p17) target = $region8
  $region5: #{scam_s_forward.2} parent=0 // loop_body
    %s21 = ssub.s32 %s16, 1
    %s22 = ssub.s32 %s16, 2
    %s32 = sadd.s32 1, %s25
    %p33 = scmp.ge.s32.totalorder %s32, 1
    %s34 = scalar_select %p33, 0, %s32
    %s35 = sadd.s32 1, %s24
    %s36 = scalar_select %p33, %s35, %s24
    %p37 = scmp.ge.s32.totalorder %s36, 1
    %s38 = scalar_select %p37, 0, %s36
    %s39 = sadd.s32 1, %s23
    %s40 = scalar_select %p37, %s39, %s23
    %p41 = scmp.ge.s32.totalorder %s40, 2
    %s42 = scalar_select %p41, 0, %s40
    %s43 = sadd.s32 %s24, %s25
    %s44 = sadd.s32 %s38, %s34
    %s45 = ssub.s32 %s23, %s42
    %s46 = ssub.s32 %s43, %s44
    %s47 = sor.u32 %s45, %s46
    %p48 = scmp.eq.s32.totalorder %s47, 0
    %s50 = sadd.s32 %s49, 1
    %s51 = scalar_select %p48, %s49, %s50
    %p54 = pneg %p48
    %p55 = scmp.eq.s32.totalorder %s16, 1
    %p56 = por %p54, %p55
    %p57 = scmp.ne.s32.totalorder %s49, %s52
    %p58 = scmp.eq.s32.totalorder %s16, 0
    %p59 = por %p57, %p58
    %p60 = scmp.ne.s32.totalorder %s49, %s52
    %p61 = scmp.eq.s32.totalorder %s21, 1
    %p62 = por %p60, %p61
    %p63 = scmp.ne.s32.totalorder %s52, %s53
    %p64 = scmp.eq.s32.totalorder %s21, 0
    %p65 = por %p63, %p64
    %p66 = scmp.ne.s32.totalorder %s52, %s53
    %p67 = scmp.eq.s32.totalorder %s22, 1
    %p68 = por %p66, %p67
    %p70 = scmp.ne.s32.totalorder %s53, %s69
    %p71 = scmp.eq.s32.totalorder %s22, 0
    %p72 = por %p70, %p71
    %s74 = sadd.s32 %s73, 1
    %p77 = scmp.eq.s32.totalorder %s16, 1
    %p78 = scmp.ne.s32.totalorder %s73, %s75
    %p79 = scmp.eq.s32.totalorder %s16, 0
    %p80 = por %p78, %p79
    %p81 = scmp.ne.s32.totalorder %s73, %s75
    %p82 = scmp.eq.s32.totalorder %s21, 1
    %p83 = por %p81, %p82
    %p84 = scmp.ne.s32.totalorder %s75, %s76
    %p85 = scmp.eq.s32.totalorder %s21, 0
    %p86 = por %p84, %p85
    %p87 = scmp.ne.s32.totalorder %s75, %s76
    %p88 = scmp.eq.s32.totalorder %s22, 1
    %p89 = por %p87, %p88
    %p91 = scmp.ne.s32.totalorder %s76, %s90
    %p92 = scmp.eq.s32.totalorder %s22, 0
    %p93 = por %p91, %p92
    %s95 = sadd.s32 %s94, 1
    %p98 = scmp.eq.s32.totalorder %s16, 1
    %p99 = scmp.ne.s32.totalorder %s94, %s96
    %p100 = scmp.eq.s32.totalorder %s16, 0
    %p101 = por %p99, %p100
    %p102 = scmp.ne.s32.totalorder %s94, %s96
    %p103 = scmp.eq.s32.totalorder %s21, 1
    %p104 = por %p102, %p103
    %p105 = scmp.ne.s32.totalorder %s96, %s97
    %p106 = scmp.eq.s32.totalorder %s21, 0
    %p107 = por %p105, %p106
    %p108 = scmp.ne.s32.totalorder %s96, %s97
    %p109 = scmp.eq.s32.totalorder %s22, 1
    %p110 = por %p108, %p109
    %p112 = scmp.ne.s32.totalorder %s97, %s111
    %p113 = scmp.eq.s32.totalorder %s22, 0
    %p114 = por %p112, %p113
    %s116 = sadd.s32 %s115, 1
    %p119 = scmp.eq.s32.totalorder %s16, 1
    %p120 = scmp.ne.s32.totalorder %s115, %s117
    %p121 = scmp.eq.s32.totalorder %s16, 0
    %p122 = por %p120, %p121
    %p123 = scmp.ne.s32.totalorder %s115, %s117
    %p124 = scmp.eq.s32.totalorder %s21, 1
    %p125 = por %p123, %p124
    %p126 = scmp.ne.s32.totalorder %s117, %s118
    %p127 = scmp.eq.s32.totalorder %s21, 0
    %p128 = por %p126, %p127
    %p129 = scmp.ne.s32.totalorder %s117, %s118
    %p130 = scmp.eq.s32.totalorder %s22, 1
    %p131 = por %p129, %p130
    %p133 = scmp.ne.s32.totalorder %s118, %s132
    %p134 = scmp.eq.s32.totalorder %s22, 0
    %p135 = por %p133, %p134
    %s137 = sadd.s32 %s136, 1
    %p140 = scmp.eq.s32.totalorder %s16, 1
    %p141 = scmp.ne.s32.totalorder %s136, %s138
    %p142 = scmp.eq.s32.totalorder %s16, 0
    %p143 = por %p141, %p142
    %p144 = scmp.ne.s32.totalorder %s136, %s138
    %p145 = scmp.eq.s32.totalorder %s21, 1
    %p146 = por %p144, %p145
    %p147 = scmp.ne.s32.totalorder %s138, %s139
    %p148 = scmp.eq.s32.totalorder %s21, 0
    %p149 = por %p147, %p148
    %p150 = scmp.ne.s32.totalorder %s138, %s139
    %p151 = scmp.eq.s32.totalorder %s22, 1
    %p152 = por %p150, %p151
    %p154 = scmp.ne.s32.totalorder %s139, %s153
    %p155 = scmp.eq.s32.totalorder %s22, 0
    %p156 = por %p154, %p155
    %s158 = sadd.s32 %s157, 1
    %p161 = scmp.eq.s32.totalorder %s16, 1
    %p162 = scmp.ne.s32.totalorder %s157, %s159
    %p163 = scmp.eq.s32.totalorder %s16, 0
    %p164 = por %p162, %p163
    %p165 = scmp.ne.s32.totalorder %s157, %s159
    %p166 = scmp.eq.s32.totalorder %s21, 1
    %p167 = por %p165, %p166
    %p168 = scmp.ne.s32.totalorder %s159, %s160
    %p169 = scmp.eq.s32.totalorder %s21, 0
    %p170 = por %p168, %p169
    %p171 = scmp.ne.s32.totalorder %s159, %s160
    %p172 = scmp.eq.s32.totalorder %s22, 1
    %p173 = por %p171, %p172
    %p175 = scmp.ne.s32.totalorder %s160, %s174
    %p176 = scmp.eq.s32.totalorder %s22, 0
    %p177 = por %p175, %p176
    %s179 = sadd.s32 %s178, 1
    %p182 = scmp.eq.s32.totalorder %s16, 1
    %p183 = scmp.ne.s32.totalorder %s178, %s180
    %p184 = scmp.eq.s32.totalorder %s16, 0
    %p185 = por %p183, %p184
    %p186 = scmp.ne.s32.totalorder %s178, %s180
    %p187 = scmp.eq.s32.totalorder %s21, 1
    %p188 = por %p186, %p187
    %p189 = scmp.ne.s32.totalorder %s180, %s181
    %p190 = scmp.eq.s32.totalorder %s21, 0
    %p191 = por %p189, %p190
    %p192 = scmp.ne.s32.totalorder %s180, %s181
    %p193 = scmp.eq.s32.totalorder %s22, 1
    %p194 = por %p192, %p193
    %p196 = scmp.ne.s32.totalorder %s181, %s195
    %p197 = scmp.eq.s32.totalorder %s22, 0
    %p198 = por %p196, %p197
    %s199 = sadd.s32 %s24, %s25
    %s200 = sadd.s32 %s38, %s34
    %s201 = ssub.s32 %s23, %s42
    %s202 = ssub.s32 %s199, %s200
    %s203 = sor.u32 %s201, %s202
    %p204 = scmp.eq.s32.totalorder %s203, 0
    %s206 = sadd.s32 %s205, 1
    %s207 = scalar_select %p204, %s205, %s206
    %p210 = pneg %p204
    %p211 = scmp.eq.s32.totalorder %s16, 1
    %p212 = por %p210, %p211
    %p213 = scmp.ne.s32.totalorder %s205, %s208
    %p214 = scmp.eq.s32.totalorder %s16, 0
    %p215 = por %p213, %p214
    %p216 = scmp.ne.s32.totalorder %s205, %s208
    %p217 = scmp.eq.s32.totalorder %s21, 1
    %p218 = por %p216, %p217
    %p219 = scmp.ne.s32.totalorder %s208, %s209
    %p220 = scmp.eq.s32.totalorder %s21, 0
    %p221 = por %p219, %p220
    %p222 = scmp.ne.s32.totalorder %s208, %s209
    %p223 = scmp.eq.s32.totalorder %s22, 1
    %p224 = por %p222, %p223
    %p226 = scmp.ne.s32.totalorder %s209, %s225
    %p227 = scmp.eq.s32.totalorder %s22, 0
    %p228 = por %p226, %p227
    %s229 = ssub.s32 %s23, %s42
    %s230 = ssub.s32 %s24, %s38
    %s231 = sor.u32 %s229, %s230
    %p232 = scmp.eq.s32.totalorder %s231, 0
    %s234 = sadd.s32 %s233, 1
    %s235 = scalar_select %p232, %s233, %s234
    %p238 = pneg %p232
    %p239 = scmp.eq.s32.totalorder %s16, 1
    %p240 = por %p238, %p239
    %p241 = scmp.ne.s32.totalorder %s233, %s236
    %p242 = scmp.eq.s32.totalorder %s16, 0
    %p243 = por %p241, %p242
    %p244 = scmp.ne.s32.totalorder %s233, %s236
    %p245 = scmp.eq.s32.totalorder %s21, 1
    %p246 = por %p244, %p245
    %p247 = scmp.ne.s32.totalorder %s236, %s237
    %p248 = scmp.eq.s32.totalorder %s21, 0
    %p249 = por %p247, %p248
    %p250 = scmp.ne.s32.totalorder %s236, %s237
    %p251 = scmp.eq.s32.totalorder %s22, 1
    %p252 = por %p250, %p251
    %p254 = scmp.ne.s32.totalorder %s237, %s253
    %p255 = scmp.eq.s32.totalorder %s22, 0
    %p256 = por %p254, %p255
    %p257 = scmp.le.s32.totalorder 1, %s16
    %p258 = scmp.lt.s32.totalorder %s16, 3
    %p259 = pnand %p257, %p258
    %p260 = pneg %p259
    // Predicated region
    $region9: #{scam_s_forward.2} parent=5 // pred_check
      _
    $region10: #{scam_s_forward.2} parent=5 // pred_check_branch
      %262 = sbr.rel (%p259) target = $region12
    $region11: #{scam_s_forward.2} parent=5 // pred_region
      %s263 = ssub.s32 %s16, 1
      // Predicated region
      $region13: #{scam_s_forward.2} parent=11 // pred_check
        %p264 = pneg %p86
      $region14: #{scam_s_forward.2} parent=11 // pred_check_branch
        %266 = sbr.rel (%p264) target = $region16
      $region15: #{scam_s_forward.2} parent=11 // pred_region
        _
      $region16: #{scam_s_forward.2} parent=11 // pred_fallthru
        _
      // Predicated region
      $region17: #{scam_s_forward.2} parent=11 // pred_check
        %p267 = pneg %p107
      $region18: #{scam_s_forward.2} parent=11 // pred_check_branch
        %269 = sbr.rel (%p267) target = $region20
      $region19: #{scam_s_forward.2} parent=11 // pred_region
        _
      $region20: #{scam_s_forward.2} parent=11 // pred_fallthru
        _
      // Predicated region
      $region21: #{scam_s_forward.2} parent=11 // pred_check
        %p270 = pneg %p128
      $region22: #{scam_s_forward.2} parent=11 // pred_check_branch
        %272 = sbr.rel (%p270) target = $region24
      $region23: #{scam_s_forward.2} parent=11 // pred_region
        _
      $region24: #{scam_s_forward.2} parent=11 // pred_fallthru
        _
      // Predicated region
      $region25: #{scam_s_forward.2} parent=11 // pred_check
        %p273 = pneg %p149
      $region26: #{scam_s_forward.2} parent=11 // pred_check_branch
        %275 = sbr.rel (%p273) target = $region28
      $region27: #{scam_s_forward.2} parent=11 // pred_region
        _
      $region28: #{scam_s_forward.2} parent=11 // pred_fallthru
        _
      // Predicated region
      $region29: #{scam_s_forward.2} parent=11 // pred_check
        %p276 = pneg %p170
      $region30: #{scam_s_forward.2} parent=11 // pred_check_branch
        %278 = sbr.rel (%p276) target = $region32
      $region31: #{scam_s_forward.2} parent=11 // pred_region
        _
      $region32: #{scam_s_forward.2} parent=11 // pred_fallthru
        _
      // Predicated region
      $region33: #{scam_s_forward.2} parent=11 // pred_check
        %p279 = pneg %p191
      $region34: #{scam_s_forward.2} parent=11 // pred_check_branch
        %281 = sbr.rel (%p279) target = $region36
      $region35: #{scam_s_forward.2} parent=11 // pred_region
        _
      $region36: #{scam_s_forward.2} parent=11 // pred_fallthru
        _
    $region12: #{scam_s_forward.2} parent=5 // pred_fallthru
      _
    %p282 = scmp.lt.s32.totalorder %s16, 2
    // Predicated region
    $region37: #{scam_s_forward.2} parent=5 // pred_check
      %p283 = pneg %p282
    $region38: #{scam_s_forward.2} parent=5 // pred_check_branch
      %285 = sbr.rel (%p283) target = $region40
    $region39: #{scam_s_forward.2} parent=5 // pred_region
      // Predicated region
      $region41: #{scam_s_forward.2} parent=39 // pred_check
        %p286 = pneg %p59
      $region42: #{scam_s_forward.2} parent=39 // pred_check_branch
        %288 = sbr.rel (%p286) target = $region44
      $region43: #{scam_s_forward.2} parent=39 // pred_region
        %s289 = sadd.s32 %s24, %s25
        %s290 = smul.u32 2, %s289
        %p291 = scmp.lt.s32.totalorder %s23, 1
        %s292 = scalar_select %p291, %s23, 1
        %p293 = scmp.lt.s32.totalorder %s290, 1
        %s294 = scalar_select %p293, %s290, 1
        %s295 = smul.addr %s292, 2
        %s296 = sadd.s32 %s294, %s295
        %s297 = smul.addr %s296, 4
        %s298 = scalar_lea.vmem %s0, %s297
        %s299 = sadd.s32 %s24, %s25
        %s300 = smul.u32 2, %s299
      $region44: #{scam_s_forward.2} parent=39 // pred_fallthru
        _
    $region40: #{scam_s_forward.2} parent=5 // pred_fallthru
      _
    %p301 = scmp.le.s32.totalorder 1, %s16
    %p302 = scmp.lt.s32.totalorder %s16, 3
    %p303 = pnand %p301, %p302
    %p304 = pneg %p303
    // Predicated region
    $region45: #{scam_s_forward.2} parent=5 // pred_check
      _
    $region46: #{scam_s_forward.2} parent=5 // pred_check_branch
      %306 = sbr.rel (%p303) target = $region48
    $region47: #{scam_s_forward.2} parent=5 // pred_region
      %s307 = ssub.s32 %s16, 1
      %s308 = sadd.s32 %s27, %s28
      %s309 = smul.u32 2, %s308
      %p310 = scmp.lt.s32.totalorder %s26, 1
      %s311 = scalar_select %p310, %s26, 1
      %p312 = scmp.lt.s32.totalorder %s309, 1
      %s313 = scalar_select %p312, %s309, 1
      %s314 = smul.addr %s311, 2
      %s315 = sadd.s32 %s313, %s314
      %s316 = smul.addr %s315, 4
      %s317 = scalar_lea.vmem %s0, %s316
      %p318 = pneg %p65
      %p319 = pneg %p62
      %p320 = pneg %p86
      %p321 = pneg %p83
      %p322 = pneg %p107
      %p323 = pneg %p104
      %p324 = pneg %p128
      %p325 = pneg %p125
      %p326 = pneg %p149
      %p327 = pneg %p146
      %p328 = pneg %p170
      %p329 = pneg %p167
      %p330 = pneg %p191
      %p331 = pneg %p188
      %p332 = pneg %p221
      %p333 = pneg %p218
      %s334 = sadd.s32 %s27, %s28
      %s335 = smul.u32 2, %s334
      %p336 = scmp.lt.s32.totalorder %s26, 1
      %s337 = scalar_select %p336, %s26, 1
      %p338 = scmp.lt.s32.totalorder %s335, 1
      %s339 = scalar_select %p338, %s335, 1
      %s340 = smul.addr %s337, 2
      %s341 = sadd.s32 %s339, %s340
      %s342 = scalar_lea.vmem %s7, %s341
      %p343 = pneg %p249
      %p344 = pneg %p246
      %p345 = scmp.lt.s32.totalorder %s26, 1
      %s346 = scalar_select %p345, %s26, 1
      %p347 = scmp.lt.s32.totalorder %s27, 0
      %s348 = scalar_select %p347, %s27, 0
      %s349 = sadd.s32 %s348, %s346
      %s350 = smul.addr %s349, 4
      %s351 = scalar_lea.vmem %s8, %s350
      %s352 = sadd.s32 %s27, %s28
      %s353 = smul.u32 2, %s352
      %p354 = scmp.lt.s32.totalorder %s26, 1
      %s355 = scalar_select %p354, %s26, 1
      %p356 = scmp.lt.s32.totalorder %s353, 1
      %s357 = scalar_select %p356, %s353, 1
      %s358 = smul.addr %s355, 2
      %s359 = sadd.s32 %s357, %s358
      %s360 = smul.addr %s359, 4
      %s361 = scalar_lea.vmem %s0, %s360
      %s362 = sadd.s32 %s27, %s28
      %s363 = smul.u32 2, %s362
      %s364 = sadd.s32 %s27, %s28
      %s365 = smul.u32 2, %s364
      %p366 = scmp.lt.s32.totalorder %s26, 1
      %s367 = scalar_select %p366, %s26, 1
      %p368 = scmp.lt.s32.totalorder %s365, 1
      %s369 = scalar_select %p368, %s365, 1
      %s370 = smul.addr %s367, 2
      %s371 = sadd.s32 %s369, %s370
      %s372 = scalar_lea.vmem %s7, %s371
      %s373 = sadd.s32 %s27, %s28
      %s374 = smul.u32 2, %s373
      %p375 = scmp.lt.s32.totalorder %s26, 1
      %s376 = scalar_select %p375, %s26, 1
      %p377 = scmp.lt.s32.totalorder %s27, 0
      %s378 = scalar_select %p377, %s27, 0
      %s379 = sadd.s32 %s378, %s376
      %s380 = smul.addr %s379, 4
      %s381 = scalar_lea.vmem %s8, %s380
      %p382 = scmp.eq.s32.totalorder %s28, 0
      // Predicated region
      $region49: #{scam_s_forward.2} parent=47 // pred_check
        %p383 = pneg %p382
      $region50: #{scam_s_forward.2} parent=47 // pred_check_branch
        %385 = sbr.rel (%p383) target = $region52
      $region51: #{scam_s_forward.2} parent=47 // pred_region
        %vm386 = vcmask 3072
        %387 = vst.msk [vmem:[%s381] sm:$0xf] %vm386, 0.0
      $region52: #{scam_s_forward.2} parent=47 // pred_fallthru
        _
      %v388 = vld [vmem:[%s361] sm:$0xff]
      %v389 = vld [vmem:[%s1] sm:$0xff]
      %v390 = vld [vmem:[%s1 + $0x8] sm:$0xff]
      %v391 = vld [vmem:[%s1 + $0x10] sm:$0xff]
      %v392 = vld [vmem:[%s1 + $0x18] sm:$0xff]
      %v393 = vld [vmem:[%s1 + $0x20] sm:$0xff]
      %v394 = vld [vmem:[%s1 + $0x28] sm:$0xff]
      %v395 = vld [vmem:[%s1 + $0x30] sm:$0xff]
      %v396 = vld [vmem:[%s1 + $0x38] sm:$0xff]
      %v397 = vld [vmem:[%s1 + $0x40] sm:$0x1]
      %v398 = vld [vmem:[%s2] sm:$0xff]
      %v399 = vld [vmem:[%s2 + $0x8] sm:$0xff]
      %v400 = vld [vmem:[%s2 + $0x10] sm:$0xff]
      %v401 = vld [vmem:[%s2 + $0x18] sm:$0xff]
      %v402 = vld [vmem:[%s2 + $0x20] sm:$0xff]
      %v403 = vld [vmem:[%s2 + $0x28] sm:$0xff]
      %v404 = vld [vmem:[%s2 + $0x30] sm:$0xff]
      %v405 = vld [vmem:[%s2 + $0x38] sm:$0xff]
      %v406 = vld [vmem:[%s2 + $0x40] sm:$0x1]
      %408 = vset.pattern.permute.xlu0 0
      %409 = vperm.xlu0 %408, %v398
      %v410 = vpop.permute.xlu0 %409
      %413 = vset.pattern.permute.xlu0 0
      %414 = vperm.xlu0 %413, %v399
      %v415 = vpop.permute.xlu0 %414
      %418 = vset.pattern.permute.xlu0 0
      %419 = vperm.xlu0 %418, %v400
      %v420 = vpop.permute.xlu0 %419
      %423 = vset.pattern.permute.xlu0 0
      %424 = vperm.xlu0 %423, %v401
      %v425 = vpop.permute.xlu0 %424
      %428 = vset.pattern.permute.xlu0 0
      %429 = vperm.xlu0 %428, %v402
      %v430 = vpop.permute.xlu0 %429
      %433 = vset.pattern.permute.xlu0 0
      %434 = vperm.xlu0 %433, %v403
      %v435 = vpop.permute.xlu0 %434
      %438 = vset.pattern.permute.xlu0 0
      %439 = vperm.xlu0 %438, %v404
      %v440 = vpop.permute.xlu0 %439
      %443 = vset.pattern.permute.xlu0 0
      %444 = vperm.xlu0 %443, %v405
      %v445 = vpop.permute.xlu0 %444
      %448 = vset.pattern.permute.xlu0 0
      %449 = vperm.xlu0 %448, %v406
      %v450 = vpop.permute.xlu0 %449
      %453 = vst [vmem:[#allocation1] ss:$2 sm:$0xff] %v388
      %v454 = vld.sshfl [vmem:[#allocation1] sm:$0xff pattern:$0x75316420]
      %v455 = vld.sshfl [vmem:[#allocation1 + $0x8] sm:$0xff pattern:$0x75316420]
      %vm456 = vcmask 31744
      %v458 = vsel %vm456, %v389, 0
      %v461 = vsel %vm456, %v390, 0
      %v464 = vsel %vm456, %v391, 0
      %v467 = vsel %vm456, %v392, 0
      %v470 = vsel %vm456, %v393, 0
      %v473 = vsel %vm456, %v394, 0
      %v476 = vsel %vm456, %v395, 0
      %v479 = vsel %vm456, %v396, 0
      %v482 = vsel %vm456, %v397, 0
      %vm484 = vcmask 1043456
      %v485 = vsel %vm484, %v454, 0
      %v487 = vsel %vm484, %v455, 0
      %489 = vmatpush.msra.mxu0 0.0
      %490 = vmatpush.msra.mxu0 0.0
      %491 = vmatpush.msra.mxu0 0.0
      %492 = vmatpush.msra.mxu0 0.0
      %493 = vmatpush.msra.mxu0 0.0
      %494 = vmatpush.msra.mxu0 0.0
      %495 = vmatpush.msra.mxu0 0.0
      %496 = vmatpush.msra.mxu0 0.0
      %497 = vmatpush.msra.mxu0 0.0
      %498 = vmatpush.msra.mxu0 0.0
      %499 = vmatpush.msra.mxu0 0.0
      %500 = vmatpush.msra.mxu0 0.0
      %501 = vmatpush.msra.mxu0 0.0
      %502 = vmatpush.msra.mxu0 0.0
      %503 = vmatpush.msra.mxu0 0.0
      %504 = vmatpush.msra.mxu0 %v485
      %505 = vmatmul.f32.gmra.mxu0 %v458
      %v506 = vpop.f32.mrf.mxu0
      %v507 = vadd.f32 %v410, %v506
      %508 = vmatmul.f32.gmra.mxu0 %v461
      %v509 = vpop.f32.mrf.mxu0
      %v510 = vadd.f32 %v415, %v509
      %511 = vmatmul.f32.gmra.mxu0 %v464
      %v512 = vpop.f32.mrf.mxu0
      %v513 = vadd.f32 %v420, %v512
      %514 = vmatmul.f32.gmra.mxu0 %v467
      %v515 = vpop.f32.mrf.mxu0
      %v516 = vadd.f32 %v425, %v515
      %517 = vmatmul.f32.gmra.mxu0 %v470
      %v518 = vpop.f32.mrf.mxu0
      %v519 = vadd.f32 %v430, %v518
      %520 = vmatmul.f32.gmra.mxu0 %v473
      %v521 = vpop.f32.mrf.mxu0
      %v522 = vadd.f32 %v435, %v521
      %523 = vmatmul.f32.gmra.mxu0 %v476
      %v524 = vpop.f32.mrf.mxu0
      %v525 = vadd.f32 %v440, %v524
      %526 = vmatmul.f32.gmra.mxu0 %v479
      %v527 = vpop.f32.mrf.mxu0
      %v528 = vadd.f32 %v445, %v527
      %529 = vmatmul.f32.gmra.mxu0 %v482
      %v530 = vpop.f32.mrf.mxu0
      %v531 = vadd.f32 %v450, %v530
      %532 = vdwg.mxu0
      %533 = vmatpush.msra.mxu0 0.0
      %534 = vmatpush.msra.mxu0 0.0
      %535 = vmatpush.msra.mxu0 0.0
      %536 = vmatpush.msra.mxu0 0.0
      %537 = vmatpush.msra.mxu0 0.0
      %538 = vmatpush.msra.mxu0 0.0
      %539 = vmatpush.msra.mxu0 0.0
      %540 = vmatpush.msra.mxu0 0.0
      %541 = vmatpush.msra.mxu0 0.0
      %542 = vmatpush.msra.mxu0 0.0
      %543 = vmatpush.msra.mxu0 0.0
      %544 = vmatpush.msra.mxu0 0.0
      %545 = vmatpush.msra.mxu0 0.0
      %546 = vmatpush.msra.mxu0 0.0
      %547 = vmatpush.msra.mxu0 0.0
      %548 = vmatpush.msra.mxu0 %v487
      %549 = vmatmul.f32.gmra.mxu0 %v458
      %v550 = vpop.f32.mrf.mxu0
      %v551 = vadd.f32 %v410, %v550
      %552 = vmatmul.f32.gmra.mxu0 %v461
      %v553 = vpop.f32.mrf.mxu0
      %v554 = vadd.f32 %v415, %v553
      %555 = vmatmul.f32.gmra.mxu0 %v464
      %v556 = vpop.f32.mrf.mxu0
      %v557 = vadd.f32 %v420, %v556
      %558 = vmatmul.f32.gmra.mxu0 %v467
      %v559 = vpop.f32.mrf.mxu0
      %v560 = vadd.f32 %v425, %v559
      %561 = vmatmul.f32.gmra.mxu0 %v470
      %v562 = vpop.f32.mrf.mxu0
      %v563 = vadd.f32 %v430, %v562
      %564 = vmatmul.f32.gmra.mxu0 %v473
      %v565 = vpop.f32.mrf.mxu0
      %v566 = vadd.f32 %v435, %v565
      %567 = vmatmul.f32.gmra.mxu0 %v476
      %v568 = vpop.f32.mrf.mxu0
      %v569 = vadd.f32 %v440, %v568
      %570 = vmatmul.f32.gmra.mxu0 %v479
      %v571 = vpop.f32.mrf.mxu0
      %v572 = vadd.f32 %v445, %v571
      %573 = vmatmul.f32.gmra.mxu0 %v482
      %v574 = vpop.f32.mrf.mxu0
      %v575 = vadd.f32 %v450, %v574
      %576 = vdwg.mxu0
      %v577 = vmax.f32 %v507, 0.0
      %v578 = vmax.f32 %v551, 0.0
      %v579 = vmax.f32 %v510, 0.0
      %v580 = vmax.f32 %v554, 0.0
      %v581 = vmax.f32 %v513, 0.0
      %v582 = vmax.f32 %v557, 0.0
      %v583 = vmax.f32 %v516, 0.0
      %v584 = vmax.f32 %v560, 0.0
      %v585 = vmax.f32 %v519, 0.0
      %v586 = vmax.f32 %v563, 0.0
      %v587 = vmax.f32 %v522, 0.0
      %v588 = vmax.f32 %v566, 0.0
      %v589 = vmax.f32 %v525, 0.0
      %v590 = vmax.f32 %v569, 0.0
      %v591 = vmax.f32 %v528, 0.0
      %v592 = vmax.f32 %v572, 0.0
      %v593 = vxor.u32 %v531, 2147483648
      %v594 = vxor.u32 %v575, 2147483648
      %v595 = vmul.f32 %v593, 1.442695
      %v596 = vpow.pop %v595
      %v597 = vmul.f32 %v594, 1.442695
      %v598 = vpow.pop %v597
      %v599 = vadd.f32 %v596, 1.0
      %v600 = vadd.f32 %v598, 1.0
      %v601 = vrcp.pop %v599
      %v602 = vmul.f32 %v599, %v601
      %v603 = vsub.f32 1.0, %v602
      %v604 = vmul.f32 %v601, %v603
      %v605 = vadd.f32 %v601, %v604
      %vm606 = vweird.f32 %v599
      %vm607 = vweird.f32 %v601
      %vm608 = vmor %vm606, %vm607
      %v609 = vsel %vm608, %v601, %v605
      %v610 = vand.u32 2147483647, %v599
      %vm611 = vcmp.eq.f32.partialorder %v610, 8.507059e+37
      %v612 = vand.u32 %v599, 2147483648
      %v613 = vor.u32 1.1754944e-38, %v612
      %v614 = vsel %vm611, %v613, %v609
      %v615 = vmul.f32 1.0, %v614
      %v616 = vrcp.pop %v600
      %v617 = vmul.f32 %v600, %v616
      %v618 = vsub.f32 1.0, %v617
      %v619 = vmul.f32 %v616, %v618
      %v620 = vadd.f32 %v616, %v619
      %vm621 = vweird.f32 %v600
      %vm622 = vweird.f32 %v616
      %vm623 = vmor %vm621, %vm622
      %v624 = vsel %vm623, %v616, %v620
      %v625 = vand.u32 2147483647, %v600
      %vm626 = vcmp.eq.f32.partialorder %v625, 8.507059e+37
      %v627 = vand.u32 %v600, 2147483648
      %v628 = vor.u32 1.1754944e-38, %v627
      %v629 = vsel %vm626, %v628, %v624
      %v630 = vmul.f32 1.0, %v629
      %v631 = vld [vmem:[%s3] sm:$0xff]
      %v632 = vld [vmem:[%s3 + $0x8] sm:$0xff]
      %v633 = vld [vmem:[%s3 + $0x10] sm:$0xff]
      %v634 = vld [vmem:[%s3 + $0x18] sm:$0xff]
      %v635 = vld [vmem:[%s3 + $0x20] sm:$0x1]
      %v636 = vld [vmem:[%s4] sm:$0xff]
      %v637 = vld [vmem:[%s4 + $0x8] sm:$0xff]
      %v638 = vld [vmem:[%s4 + $0x10] sm:$0xff]
      %v639 = vld [vmem:[%s4 + $0x18] sm:$0xff]
      %v640 = vld [vmem:[%s4 + $0x20] sm:$0x1]
      %642 = vset.pattern.permute.xlu0 0
      %643 = vperm.xlu0 %642, %v636
      %v644 = vpop.permute.xlu0 %643
      %647 = vset.pattern.permute.xlu0 0
      %648 = vperm.xlu0 %647, %v637
      %v649 = vpop.permute.xlu0 %648
      %652 = vset.pattern.permute.xlu0 0
      %653 = vperm.xlu0 %652, %v638
      %v654 = vpop.permute.xlu0 %653
      %657 = vset.pattern.permute.xlu0 0
      %658 = vperm.xlu0 %657, %v639
      %v659 = vpop.permute.xlu0 %658
      %662 = vset.pattern.permute.xlu0 0
      %663 = vperm.xlu0 %662, %v640
      %v664 = vpop.permute.xlu0 %663
      %vm666 = vcmask 261120
      %v668 = vsel %vm666, %v631, 0
      %v671 = vsel %vm666, %v632, 0
      %v674 = vsel %vm666, %v633, 0
      %v677 = vsel %vm666, %v634, 0
      %v680 = vsel %vm666, %v635, 0
      %682 = vmatpush.msra.mxu0 0.0
      %683 = vmatpush.msra.mxu0 0.0
      %684 = vmatpush.msra.mxu0 0.0
      %685 = vmatpush.msra.mxu0 0.0
      %686 = vmatpush.msra.mxu0 0.0
      %687 = vmatpush.msra.mxu0 0.0
      %688 = vmatpush.msra.mxu0 0.0
      %689 = vmatpush.msra.mxu0 0.0
      %690 = vmatpush.msra.mxu0 0.0
      %691 = vmatpush.msra.mxu0 0.0
      %692 = vmatpush.msra.mxu0 0.0
      %693 = vmatpush.msra.mxu0 0.0
      %694 = vmatpush.msra.mxu0 %v583
      %695 = vmatpush.msra.mxu0 %v581
      %696 = vmatpush.msra.mxu0 %v579
      %697 = vmatpush.msra.mxu0 %v577
      %698 = vmatmul.f32.gmra.mxu0 %v668
      %v699 = vpop.f32.mrf.mxu0
      %v700 = vadd.f32 %v644, %v699
      %701 = vmatmul.f32.gmra.mxu0 %v671
      %v702 = vpop.f32.mrf.mxu0
      %v703 = vadd.f32 %v649, %v702
      %704 = vmatmul.f32.gmra.mxu0 %v674
      %v705 = vpop.f32.mrf.mxu0
      %v706 = vadd.f32 %v654, %v705
      %707 = vmatmul.f32.gmra.mxu0 %v677
      %v708 = vpop.f32.mrf.mxu0
      %v709 = vadd.f32 %v659, %v708
      %710 = vmatmul.f32.gmra.mxu0 %v680
      %v711 = vpop.f32.mrf.mxu0
      %v712 = vadd.f32 %v664, %v711
      %713 = vdwg.mxu0
      %714 = vmatpush.msra.mxu0 0.0
      %715 = vmatpush.msra.mxu0 0.0
      %716 = vmatpush.msra.mxu0 0.0
      %717 = vmatpush.msra.mxu0 0.0
      %718 = vmatpush.msra.mxu0 0.0
      %719 = vmatpush.msra.mxu0 0.0
      %720 = vmatpush.msra.mxu0 0.0
      %721 = vmatpush.msra.mxu0 0.0
      %722 = vmatpush.msra.mxu0 0.0
      %723 = vmatpush.msra.mxu0 0.0
      %724 = vmatpush.msra.mxu0 0.0
      %725 = vmatpush.msra.mxu0 0.0
      %726 = vmatpush.msra.mxu0 %v584
      %727 = vmatpush.msra.mxu0 %v582
      %728 = vmatpush.msra.mxu0 %v580
      %729 = vmatpush.msra.mxu0 %v578
      %730 = vmatmul.f32.gmra.mxu0 %v668
      %v731 = vpop.f32.mrf.mxu0
      %v732 = vadd.f32 %v644, %v731
      %733 = vmatmul.f32.gmra.mxu0 %v671
      %v734 = vpop.f32.mrf.mxu0
      %v735 = vadd.f32 %v649, %v734
      %736 = vmatmul.f32.gmra.mxu0 %v674
      %v737 = vpop.f32.mrf.mxu0
      %v738 = vadd.f32 %v654, %v737
      %739 = vmatmul.f32.gmra.mxu0 %v677
      %v740 = vpop.f32.mrf.mxu0
      %v741 = vadd.f32 %v659, %v740
      %742 = vmatmul.f32.gmra.mxu0 %v680
      %v743 = vpop.f32.mrf.mxu0
      %v744 = vadd.f32 %v664, %v743
      %745 = vdwg.mxu0
      %v746 = vmax.f32 %v700, 0.0
      %v747 = vmax.f32 %v732, 0.0
      %v748 = vmax.f32 %v703, 0.0
      %v749 = vmax.f32 %v735, 0.0
      %v750 = vmax.f32 %v706, 0.0
      %v751 = vmax.f32 %v738, 0.0
      %v752 = vmax.f32 %v709, 0.0
      %v753 = vmax.f32 %v741, 0.0
      %v754 = vadd.f32 %v585, %v746
      %v755 = vadd.f32 %v586, %v747
      %v756 = vadd.f32 %v587, %v748
      %v757 = vadd.f32 %v588, %v749
      %v758 = vadd.f32 %v589, %v750
      %v759 = vadd.f32 %v590, %v751
      %v760 = vadd.f32 %v591, %v752
      %v761 = vadd.f32 %v592, %v753
      %v762 = vxor.u32 %v712, 2147483648
      %v763 = vxor.u32 %v744, 2147483648
      %v764 = vmul.f32 %v762, 1.442695
      %v765 = vpow.pop %v764
      %v766 = vmul.f32 %v763, 1.442695
      %v767 = vpow.pop %v766
      %v768 = vadd.f32 %v765, 1.0
      %v769 = vadd.f32 %v767, 1.0
      %v770 = vrcp.pop %v768
      %v771 = vmul.f32 %v768, %v770
      %v772 = vsub.f32 1.0, %v771
      %v773 = vmul.f32 %v770, %v772
      %v774 = vadd.f32 %v770, %v773
      %vm775 = vweird.f32 %v768
      %vm776 = vweird.f32 %v770
      %vm777 = vmor %vm775, %vm776
      %v778 = vsel %vm777, %v770, %v774
      %v779 = vand.u32 2147483647, %v768
      %vm780 = vcmp.eq.f32.partialorder %v779, 8.507059e+37
      %v781 = vand.u32 %v768, 2147483648
      %v782 = vor.u32 1.1754944e-38, %v781
      %v783 = vsel %vm780, %v782, %v778
      %v784 = vmul.f32 1.0, %v783
      %v785 = vrcp.pop %v769
      %v786 = vmul.f32 %v769, %v785
      %v787 = vsub.f32 1.0, %v786
      %v788 = vmul.f32 %v785, %v787
      %v789 = vadd.f32 %v785, %v788
      %vm790 = vweird.f32 %v769
      %vm791 = vweird.f32 %v785
      %vm792 = vmor %vm790, %vm791
      %v793 = vsel %vm792, %v785, %v789
      %v794 = vand.u32 2147483647, %v769
      %vm795 = vcmp.eq.f32.partialorder %v794, 8.507059e+37
      %v796 = vand.u32 %v769, 2147483648
      %v797 = vor.u32 1.1754944e-38, %v796
      %v798 = vsel %vm795, %v797, %v793
      %v799 = vmul.f32 1.0, %v798
      %v800 = vld [vmem:[%s5] sm:$0xff]
      %v801 = vld [vmem:[%s5 + $0x8] sm:$0xff]
      %v802 = vld [vmem:[%s5 + $0x10] sm:$0xff]
      %v803 = vld [vmem:[%s5 + $0x18] sm:$0xff]
      %805 = vset.pattern.permute.xlu0 0
      %806 = vperm.xlu0 %805, %v800
      %v807 = vpop.permute.xlu0 %806
      %810 = vset.pattern.permute.xlu0 0
      %811 = vperm.xlu0 %810, %v801
      %v812 = vpop.permute.xlu0 %811
      %815 = vset.pattern.permute.xlu0 0
      %816 = vperm.xlu0 %815, %v802
      %v817 = vpop.permute.xlu0 %816
      %820 = vset.pattern.permute.xlu0 0
      %821 = vperm.xlu0 %820, %v803
      %v822 = vpop.permute.xlu0 %821
      %v824 = vmul.f32 %v754, %v807
      %v825 = vmul.f32 %v755, %v807
      %v826 = vmul.f32 %v756, %v812
      %v827 = vmul.f32 %v757, %v812
      %v828 = vmul.f32 %v758, %v817
      %v829 = vmul.f32 %v759, %v817
      %v830 = vmul.f32 %v760, %v822
      %v831 = vmul.f32 %v761, %v822
      %v832 = vadd.f32 %v824, %v826
      %v833 = vadd.f32 %v832, %v828
      %v834 = vadd.f32 %v833, %v830
      %v835 = vrot.slane %v834, 4
      %v836 = vadd.f32 %v834, %v835
      %v837 = vrot.slane %v836, 2
      %v838 = vadd.f32 %v836, %v837
      %v839 = vrot.slane %v838, 1
      %v840 = vadd.f32 %v838, %v839
      %v841 = vadd.f32 %v825, %v827
      %v842 = vadd.f32 %v841, %v829
      %v843 = vadd.f32 %v842, %v831
      %v844 = vrot.slane %v843, 4
      %v845 = vadd.f32 %v843, %v844
      %v846 = vrot.slane %v845, 2
      %v847 = vadd.f32 %v845, %v846
      %v848 = vrot.slane %v847, 1
      %v849 = vadd.f32 %v847, %v848
      %s850 = sld [smem:[#allocation2]]
      %v851 = vstv %s850
      %v852 = vadd.f32 %v840, %v851
      %v853 = vadd.f32 %v849, %v851
      %v854 = vxor.u32 %v852, 2147483648
      %v855 = vxor.u32 %v853, 2147483648
      %v856 = vmul.f32 %v854, 1.442695
      %v857 = vpow.pop %v856
      %v858 = vmul.f32 %v855, 1.442695
      %v859 = vpow.pop %v858
      %v860 = vadd.f32 %v857, 1.0
      %v861 = vadd.f32 %v859, 1.0
      %v862 = vrcp.pop %v860
      %v863 = vmul.f32 %v860, %v862
      %v864 = vsub.f32 1.0, %v863
      %v865 = vmul.f32 %v862, %v864
      %v866 = vadd.f32 %v862, %v865
      %vm867 = vweird.f32 %v860
      %vm868 = vweird.f32 %v862
      %vm869 = vmor %vm867, %vm868
      %v870 = vsel %vm869, %v862, %v866
      %v871 = vand.u32 2147483647, %v860
      %vm872 = vcmp.eq.f32.partialorder %v871, 8.507059e+37
      %v873 = vand.u32 %v860, 2147483648
      %v874 = vor.u32 1.1754944e-38, %v873
      %v875 = vsel %vm872, %v874, %v870
      %v876 = vmul.f32 1.0, %v875
      %v877 = vrcp.pop %v861
      %v878 = vmul.f32 %v861, %v877
      %v879 = vsub.f32 1.0, %v878
      %v880 = vmul.f32 %v877, %v879
      %v881 = vadd.f32 %v877, %v880
      %vm882 = vweird.f32 %v861
      %vm883 = vweird.f32 %v877
      %vm884 = vmor %vm882, %vm883
      %v885 = vsel %vm884, %v877, %v881
      %v886 = vand.u32 2147483647, %v861
      %vm887 = vcmp.eq.f32.partialorder %v886, 8.507059e+37
      %v888 = vand.u32 %v861, 2147483648
      %v889 = vor.u32 1.1754944e-38, %v888
      %v890 = vsel %vm887, %v889, %v885
      %v891 = vmul.f32 1.0, %v890
      %v892 = vadd.f32 %v615, %v784
      %v893 = vadd.f32 %v630, %v799
      %v894 = vadd.f32 %v892, %v876
      %v895 = vadd.f32 %v893, %v891
      %v896 = vmul.f32 %v894, 0.33333334
      %v897 = vmul.f32 %v895, 0.33333334
      %v900 = vrot.slane %v897, 7
      %vm901 = vcmask 1040384
      %v902 = vsel %vm901, %v896, %v900
      %v904 = vlaneseq
      %vm905 = vcmp.ge.s32.totalorder %v904, 0
      %vm906 = vcmp.lt.s32.totalorder %v904, 256
      %vm907 = vmand %vm905, %vm906
      %908 = vst.msk [vmem:[%s372] sm:$0x3] %vm907, %v902
      %v909 = vld [vmem:[%s381] sm:$0xf]
      %v910 = vperm.slane %v896, 0
      %v911 = vperm.slane %v897, 0
      %v914 = vrot.slane %v911, 4
      %v915 = vsel %vm484, %v910, %v914
      %v917 = vmul.f32 %v388, %v915
      %919 = vst [vmem:[#allocation1] ss:$2 sm:$0xff] %v917
      %v920 = vld.sshfl [vmem:[#allocation1] sm:$0xff pattern:$0x75316420]
      %v921 = vld.sshfl [vmem:[#allocation1 + $0x8] sm:$0xff pattern:$0x75316420]
      %v924 = vsel %vm484, %v920, 0.0
      %v925 = vsel %vm484, %v921, 0.0
      %v926 = vadd.f32 %v924, %v925
      %927 = vadd.xlane.f32.xlu0 %v926
      %v928 = vpop.xlane.xlu0 %927
      %v929 = vmul.f32 %v928, 0.00390625
      %v930 = vadd.f32 %v909, %v929
      %vm931 = vcmask 3072
      %932 = vst.msk [vmem:[%s381] sm:$0xf] %vm931, %v930
      %s933 = sadd.s32 %s27, %s28
      %s934 = smul.u32 2, %s933
      %p935 = scmp.lt.s32.totalorder %s26, 1
      %s936 = scalar_select %p935, %s26, 1
      %p937 = scmp.lt.s32.totalorder %s934, 1
      %s938 = scalar_select %p937, %s934, 1
      %s939 = smul.addr %s936, 2
      %s940 = sadd.s32 %s938, %s939
      %s941 = scalar_lea.vmem %s7, %s940
      %p942 = scmp.lt.s32.totalorder %s26, 1
      %s943 = scalar_select %p942, %s26, 1
      %p944 = scmp.lt.s32.totalorder %s27, 0
      %s945 = scalar_select %p944, %s27, 0
      %s946 = sadd.s32 %s945, %s943
      %s947 = smul.addr %s946, 4
      %s948 = scalar_lea.vmem %s8, %s947
      // Predicated region
      $region53: #{scam_s_forward.2} parent=47 // pred_check
        %p949 = pneg %p218
      $region54: #{scam_s_forward.2} parent=47 // pred_check_branch
        %951 = sbr.rel (%p949) target = $region56
      $region55: #{scam_s_forward.2} parent=47 // pred_region
        %s952 = sadd.s32 %s27, %s28
        %s953 = smul.u32 2, %s952
      $region56: #{scam_s_forward.2} parent=47 // pred_fallthru
        _
      // Predicated region
      $region57: #{scam_s_forward.2} parent=47 // pred_check
        %p954 = pneg %p246
      $region58: #{scam_s_forward.2} parent=47 // pred_check_branch
        %956 = sbr.rel (%p954) target = $region60
      $region59: #{scam_s_forward.2} parent=47 // pred_region
        _
      $region60: #{scam_s_forward.2} parent=47 // pred_fallthru
        _
    $region48: #{scam_s_forward.2} parent=5 // pred_fallthru
      _
    %p957 = scmp.le.s32.totalorder 2, %s16
    // Predicated region
    $region61: #{scam_s_forward.2} parent=5 // pred_check
      %p958 = pneg %p957
    $region62: #{scam_s_forward.2} parent=5 // pred_check_branch
      %960 = sbr.rel (%p958) target = $region64
    $region63: #{scam_s_forward.2} parent=5 // pred_region
      %s961 = ssub.s32 %s16, 2
      // Predicated region
      $region65: #{scam_s_forward.2} parent=63 // pred_check
        %p962 = pneg %p224
      $region66: #{scam_s_forward.2} parent=63 // pred_check_branch
        %964 = sbr.rel (%p962) target = $region68
      $region67: #{scam_s_forward.2} parent=63 // pred_region
        %s965 = sadd.s32 %s30, %s31
        %s966 = smul.u32 2, %s965
        %p967 = scmp.lt.s32.totalorder %s29, 1
        %s968 = scalar_select %p967, %s29, 1
        %p969 = scmp.lt.s32.totalorder %s966, 1
        %s970 = scalar_select %p969, %s966, 1
        %s971 = smul.addr %s968, 2
        %s972 = sadd.s32 %s970, %s971
        %s973 = scalar_lea.vmem %s7, %s972
      $region68: #{scam_s_forward.2} parent=63 // pred_fallthru
        _
      // Predicated region
      $region69: #{scam_s_forward.2} parent=63 // pred_check
        %p974 = pneg %p252
      $region70: #{scam_s_forward.2} parent=63 // pred_check_branch
        %976 = sbr.rel (%p974) target = $region72
      $region71: #{scam_s_forward.2} parent=63 // pred_region
        %p977 = scmp.lt.s32.totalorder %s29, 1
        %s978 = scalar_select %p977, %s29, 1
        %p979 = scmp.lt.s32.totalorder %s30, 0
        %s980 = scalar_select %p979, %s30, 0
        %s981 = sadd.s32 %s980, %s978
        %s982 = smul.addr %s981, 4
        %s983 = scalar_lea.vmem %s8, %s982
      $region72: #{scam_s_forward.2} parent=63 // pred_fallthru
        _
    $region64: #{scam_s_forward.2} parent=5 // pred_fallthru
      _
  $region6: #{scam_s_forward.2} parent=0 // loop_footer
    %s20 = sadd.s32 1, %s16
  $region7: #{scam_s_forward.2} parent=0 // loop_footer_branch
    %15 = sbr.rel target = $region3
  $region8: #{scam_s_forward.2} parent=0 // loop_exit
    _

</llo_original>
